<compile_context>
chip_gen: v5e
topology: v5e:2x2
jax: 0.10.0
libtpu: 0.0.40
codegen_flags: <defaults>
</compile_context>

<pallas_src>
from functools import partial

import jax
import jax.numpy as jnp
from jax import lax
from jax.experimental import pallas as pl
from jax.experimental.pallas import tpu as pltpu

LN_EPS = 1e-5  # PyTorch nn.LayerNorm default


# ----------------------------- in-kernel helpers -----------------------------

def _layer_norm(x, g, b):
    mean = jnp.mean(x, axis=-1, keepdims=True)
    c = x - mean
    var = jnp.mean(c * c, axis=-1, keepdims=True)
    return c * lax.rsqrt(var + LN_EPS) * g + b


def _mha(q, k, v, bias, wo_ref, bo, *, nheads, hd, collect_probs):
    """q: (lq, D), k/v: (lk, D), bias: (1, lk) additive (-1e10 at masked keys, 0 elsewhere).

    1/sqrt(hd) is already folded into q.  Per-head context is folded straight into the output
    projection via sublane slices of Wo (no lane-wise head concat).  Returns
    (out (lq, D), probs (lq, nheads*lk) | None).
    """
    lq = q.shape[0]
    D = nheads * hd
    acc = jnp.zeros((lq, D), jnp.float32)
    probs = []
    for hi in range(nheads):
        sl = slice(hi * hd, (hi + 1) * hd)
        qh = q[:, sl]                                    # (lq, hd)
        kh = k[:, sl]                                    # (lk, hd)
        vh = v[:, sl]                                    # (lk, hd)
        # energies = qh @ kh.T without an explicit transpose (contract dim 1 of both)
        e = lax.dot_general(qh, kh, dimension_numbers=(((1,), (1,)), ((), ())),
                            preferred_element_type=jnp.float32)          # (lq, lk)
        e = e + bias                                     # additive mask bias
        e = e - jnp.max(e, axis=-1, keepdims=True)
        p = jnp.exp(e)
        p = p * pl.reciprocal(jnp.sum(p, axis=-1, keepdims=True), approx=False)
        if collect_probs:
            probs.append(p)
        ctx_h = jnp.dot(p, vh, preferred_element_type=jnp.float32)        # (lq, hd)
        acc = acc + jnp.dot(ctx_h, wo_ref[sl, :], preferred_element_type=jnp.float32)
    out = acc + bo
    return out, (jnp.concatenate(probs, axis=-1) if collect_probs else None)


# ----------------------------- fused decoder-layer kernel -----------------------------

def _decoder_layer_kernel(
        tgt_ref, enc_ref, bias_t_ref, bias_s_ref,
        wqkv_s_ref, bqkv_s_ref, wo_s_ref, bo_s_ref,
        wq_e_ref, bq_e_ref, wkv_e_ref, bkv_e_ref, wo_e_ref, bo_e_ref,
        w1_ref, b1_ref, w2_ref, b2_ref,
        ln1g_ref, ln1b_ref, ln2g_ref, ln2b_ref, ln3g_ref, ln3b_ref,
        out_ref, attn_ref,
        *, nheads, hd):
    D = nheads * hd

    x = tgt_ref[...]                        # (Lq, D)  -- one batch element per program
    enc = enc_ref[...]                      # (Lk, D)
    bias_t = bias_t_ref[...]                # (1, Lq)
    bias_s = bias_s_ref[...]                # (1, Lk)

    # -------- self attention (fused QKV matmul; probs stay in-register) --------
    qkv = jnp.dot(x, wqkv_s_ref[...], preferred_element_type=jnp.float32) + bqkv_s_ref[...]
    q, k, v = qkv[:, 0:D], qkv[:, D:2 * D], qkv[:, 2 * D:3 * D]
    sa, _ = _mha(q, k, v, bias_t, wo_s_ref, bo_s_ref[...],
                 nheads=nheads, hd=hd, collect_probs=False)
    x = _layer_norm(x + sa, ln1g_ref[...], ln1b_ref[...])   # dropout == identity

    # -------- encoder-decoder attention (fused KV matmul; lane-dense prob writeback) --------
    q = jnp.dot(x, wq_e_ref[...], preferred_element_type=jnp.float32) + bq_e_ref[...]
    kv = jnp.dot(enc, wkv_e_ref[...], preferred_element_type=jnp.float32) + bkv_e_ref[...]
    k, v = kv[:, 0:D], kv[:, D:2 * D]
    ea, probs = _mha(q, k, v, bias_s, wo_e_ref, bo_e_ref[...],
                     nheads=nheads, hd=hd, collect_probs=True)
    attn_ref[...] = probs.astype(attn_ref.dtype)             # single (Lq, nheads*Lk) store
    x = _layer_norm(x + ea, ln2g_ref[...], ln2b_ref[...])

    # -------- position-wise feed-forward --------
    h = jnp.maximum(
        jnp.dot(x, w1_ref[...], preferred_element_type=jnp.float32) + b1_ref[...], 0.0)
    f = jnp.dot(h, w2_ref[...], preferred_element_type=jnp.float32) + b2_ref[...]
    x = _layer_norm(x + f, ln3g_ref[...], ln3b_ref[...])

    out_ref[...] = x.astype(out_ref.dtype)


def _replicated(arr):
    zeros = (0,) * arr.ndim
    return pl.BlockSpec(arr.shape, lambda i: zeros)


def decoder_layer(tgt, enc_src, tgt_mask, src_mask, params, nheads):
    """tgt: (b, Lq, D), enc_src: (b, Lk, D), masks: (b, L) with 0 = masked."""
    b, Lq, D = tgt.shape
    Lk = enc_src.shape[1]
    hd = D // nheads
    scale = float(hd) ** 0.5
    ps, pe = params["self_attn"], params["enc_attn"]
    PF = params["w1"].shape[1]

    # Host-side weight packing: fused QKV / KV matmuls; 1/scale folded into the Q projection.
    wqkv_s = jnp.concatenate([ps["wq"] / scale, ps["wk"], ps["wv"]], axis=1)        # (D, 3D)
    bqkv_s = jnp.concatenate([ps["bq"] / scale, ps["bk"], ps["bv"]]).reshape(1, 3 * D)
    wq_e = pe["wq"] / scale
    bq_e = (pe["bq"] / scale).reshape(1, D)
    wkv_e = jnp.concatenate([pe["wk"], pe["wv"]], axis=1)                           # (D, 2D)
    bkv_e = jnp.concatenate([pe["bk"], pe["bv"]]).reshape(1, 2 * D)

    # Additive mask biases: 0 where the key is visible, -1e10 where masked.
    bias_t = ((tgt_mask.astype(jnp.float32) - 1.0) * 1e10).reshape(b, 1, Lq)
    bias_s = ((src_mask.astype(jnp.float32) - 1.0) * 1e10).reshape(b, 1, Lk)

    weight_args = (
        wqkv_s, bqkv_s, ps["wo"], ps["bo"].reshape(1, D),
        wq_e, bq_e, wkv_e, bkv_e, pe["wo"], pe["bo"].reshape(1, D),
        params["w1"], params["b1"].reshape(1, PF), params["w2"], params["b2"].reshape(1, D),
        params["ln1_g"].reshape(1, D), params["ln1_b"].reshape(1, D),
        params["ln2_g"].reshape(1, D), params["ln2_b"].reshape(1, D),
        params["ln3_g"].reshape(1, D), params["ln3_b"].reshape(1, D),
    )

    in_specs = [
        pl.BlockSpec((None, Lq, D), lambda i: (i, 0, 0)),      # tgt      (per batch element)
        pl.BlockSpec((None, Lk, D), lambda i: (i, 0, 0)),      # enc_src
        pl.BlockSpec((None, 1, Lq), lambda i: (i, 0, 0)),      # self-attn mask bias
        pl.BlockSpec((None, 1, Lk), lambda i: (i, 0, 0)),      # enc-attn mask bias
    ] + [_replicated(w) for w in weight_args]                  # weights replicated per program

    out_specs = (
        pl.BlockSpec((None, Lq, D), lambda i: (i, 0, 0)),
        pl.BlockSpec((None, Lq, nheads * Lk), lambda i: (i, 0, 0)),
    )

    out, attn_slab = pl.pallas_call(
        partial(_decoder_layer_kernel, nheads=nheads, hd=hd),
        grid=(b,),
        in_specs=in_specs,
        out_specs=out_specs,
        out_shape=(
            jax.ShapeDtypeStruct((b, Lq, D), tgt.dtype),
            jax.ShapeDtypeStruct((b, Lq, nheads * Lk), jnp.float32),
        ),
        compiler_params=pltpu.CompilerParams(dimension_semantics=("parallel",)),
    )(tgt, enc_src, bias_t, bias_s, *weight_args)

    # Wrapper-side layout plumbing: (b, Lq, H*Lk) slab -> (b, H, Lq, Lk).
    attn = attn_slab.reshape(b, Lq, nheads, Lk).transpose(0, 2, 1, 3)
    return out, attn


# ----------------------------- parameters & pure-JAX reference -----------------------------

def init_params(key, nhid, nheads, pfdim):
    def lin(k, din, dout):
        kw, kb = jax.random.split(k)
        return (jax.random.normal(kw, (din, dout), jnp.float32) * 0.05,
                jax.random.normal(kb, (dout,), jnp.float32) * 0.05)

    keys = jax.random.split(key, 10)

    def mha_params(ks):
        wq, bq = lin(ks[0], nhid, nhid)
        wk, bk = lin(ks[1], nhid, nhid)
        wv, bv = lin(ks[2], nhid, nhid)
        wo, bo = lin(ks[3], nhid, nhid)
        return dict(wq=wq, bq=bq, wk=wk, bk=bk, wv=wv, bv=bv, wo=wo, bo=bo)

    w1, b1 = lin(keys[8], nhid, pfdim)
    w2, b2 = lin(keys[9], pfdim, nhid)
    return dict(
        self_attn=mha_params(keys[0:4]),
        enc_attn=mha_params(keys[4:8]),
        w1=w1, b1=b1, w2=w2, b2=b2,
        ln1_g=jnp.ones((nhid,), jnp.float32), ln1_b=jnp.zeros((nhid,), jnp.float32),
        ln2_g=jnp.ones((nhid,), jnp.float32), ln2_b=jnp.zeros((nhid,), jnp.float32),
        ln3_g=jnp.ones((nhid,), jnp.float32), ln3_b=jnp.zeros((nhid,), jnp.float32),
    )


def ref_mha(xq, xkv, mask, p, nheads):
    b, Lq, D = xq.shape
    Lk = xkv.shape[1]
    hd = D // nheads
    Q = (xq @ p["wq"] + p["bq"]).reshape(b, Lq, nheads, hd).transpose(0, 2, 1, 3)
    K = (xkv @ p["wk"] + p["bk"]).reshape(b, Lk, nheads, hd).transpose(0, 2, 1, 3)
    V = (xkv @ p["wv"] + p["bv"]).reshape(b, Lk, nheads, hd).transpose(0, 2, 1, 3)
    energy = jnp.einsum("bhqd,bhkd->bhqk", Q, K) / jnp.sqrt(float(hd))
    m = mask.reshape(b, 1, 1, Lk)
    energy = jnp.where(m == 0, -1e10, energy)
    attn = jax.nn.softmax(energy, axis=-1)
    ctx = jnp.einsum("bhqk,bhkd->bhqd", attn, V).transpose(0, 2, 1, 3).reshape(b, Lq, D)
    return ctx @ p["wo"] + p["bo"], attn


def ref_ln(x, g, b):
    m = jnp.mean(x, axis=-1, keepdims=True)
    v = jnp.mean((x - m) ** 2, axis=-1, keepdims=True)
    return (x - m) * lax.rsqrt(v + LN_EPS) * g + b


def ref_decoder_layer(tgt, enc_src, tgt_mask, src_mask, params, nheads):
    _t, _ = ref_mha(tgt, tgt, tgt_mask, params["self_attn"], nheads)
    tgt = ref_ln(tgt + _t, params["ln1_g"], params["ln1_b"])
    _t, attn = ref_mha(tgt, enc_src, src_mask, params["enc_attn"], nheads)
    tgt = ref_ln(tgt + _t, params["ln2_g"], params["ln2_b"])
    f = jnp.maximum(tgt @ params["w1"] + params["b1"], 0.0) @ params["w2"] + params["b2"]
    tgt = ref_ln(tgt + f, params["ln3_g"], params["ln3_b"])
    return tgt, attn


# ----------------------------- main -----------------------------

if __name__ == "__main__":
    B, TGT_LEN, SRC_LEN = 2, 8, 8
    NHID, NHEADS, PFDIM = 32, 4, 64

    root = jax.random.PRNGKey(0)
    kp, kt, ke, km1, km2 = jax.random.split(root, 5)

    params = init_params(kp, NHID, NHEADS, PFDIM)
    tgt = jax.random.normal(kt, (B, TGT_LEN, NHID), jnp.float32)
    enc_src = jax.random.normal(ke, (B, SRC_LEN, NHID), jnp.float32)
    tgt_mask = (jax.random.uniform(km1, (B, TGT_LEN)) > 0.2).astype(jnp.float32)
    src_mask = (jax.random.uniform(km2, (B, SRC_LEN)) > 0.2).astype(jnp.float32)
    # Guarantee at least one unmasked key per row (a fully-masked row would be a softmax
    # over an empty set, undefined in the reference module as well).
    tgt_mask = tgt_mask.at[:, 0].set(1.0)
    src_mask = src_mask.at[:, 0].set(1.0)

    out, attn = decoder_layer(tgt, enc_src, tgt_mask, src_mask, params, NHEADS)
    out = jax.block_until_ready(out)
    attn = jax.block_until_ready(attn)

    ref_out, ref_attn = ref_decoder_layer(tgt, enc_src, tgt_mask, src_mask, params, NHEADS)
    assert out.shape == (B, TGT_LEN, NHID)
    assert attn.shape == (B, NHEADS, TGT_LEN, SRC_LEN)
    assert jnp.allclose(out, ref_out, atol=1e-4, rtol=1e-4)
    assert jnp.allclose(attn, ref_attn, atol=1e-5, rtol=1e-4)

    # TODO(synk): dropout layers are treated as identity (inference / p=0 semantics).
    print("KERNEL_OK")
</pallas_src>

<mosaic_0001>
module attributes {stable_mosaic.version = 11 : i64} {
  func.func @_decoder_layer_kernel(%arg0: i32, %arg1: memref<1x8x32xf32, #tpu.memory_space<vmem>>, %arg2: memref<1x8x32xf32, #tpu.memory_space<vmem>>, %arg3: memref<1x1x8xf32, #tpu.memory_space<vmem>>, %arg4: memref<1x1x8xf32, #tpu.memory_space<vmem>>, %arg5: memref<32x96xf32, #tpu.memory_space<vmem>>, %arg6: memref<1x96xf32, #tpu.memory_space<vmem>>, %arg7: memref<32x32xf32, #tpu.memory_space<vmem>>, %arg8: memref<1x32xf32, #tpu.memory_space<vmem>>, %arg9: memref<32x32xf32, #tpu.memory_space<vmem>>, %arg10: memref<1x32xf32, #tpu.memory_space<vmem>>, %arg11: memref<32x64xf32, #tpu.memory_space<vmem>>, %arg12: memref<1x64xf32, #tpu.memory_space<vmem>>, %arg13: memref<32x32xf32, #tpu.memory_space<vmem>>, %arg14: memref<1x32xf32, #tpu.memory_space<vmem>>, %arg15: memref<32x64xf32, #tpu.memory_space<vmem>>, %arg16: memref<1x64xf32, #tpu.memory_space<vmem>>, %arg17: memref<64x32xf32, #tpu.memory_space<vmem>>, %arg18: memref<1x32xf32, #tpu.memory_space<vmem>>, %arg19: memref<1x32xf32, #tpu.memory_space<vmem>>, %arg20: memref<1x32xf32, #tpu.memory_space<vmem>>, %arg21: memref<1x32xf32, #tpu.memory_space<vmem>>, %arg22: memref<1x32xf32, #tpu.memory_space<vmem>>, %arg23: memref<1x32xf32, #tpu.memory_space<vmem>>, %arg24: memref<1x32xf32, #tpu.memory_space<vmem>>, %arg25: memref<1x8x32xf32, #tpu.memory_space<vmem>>, %arg26: memref<1x8x32xf32, #tpu.memory_space<vmem>>) attributes {dimension_semantics = [#tpu.dimension_semantics<parallel>], iteration_bounds = array<i64: 2>, scalar_prefetch = 0 : i64, scratch_operands = 0 : i64, tpu.core_type = #tpu.core_type<tc>, window_params = [{transform_indices = @transform_0, window_bounds = array<i64: 1, 8, 32>}, {transform_indices = @transform_1, window_bounds = array<i64: 1, 8, 32>}, {transform_indices = @transform_2, window_bounds = array<i64: 1, 1, 8>}, {transform_indices = @transform_3, window_bounds = array<i64: 1, 1, 8>}, {pipeline_mode = #tpu.pipeline_mode<synchronous>, transform_indices = @transform_4, window_bounds = array<i64: 32, 96>}, {pipeline_mode = #tpu.pipeline_mode<synchronous>, transform_indices = @transform_5, window_bounds = array<i64: 1, 96>}, {pipeline_mode = #tpu.pipeline_mode<synchronous>, transform_indices = @transform_6, window_bounds = array<i64: 32, 32>}, {pipeline_mode = #tpu.pipeline_mode<synchronous>, transform_indices = @transform_7, window_bounds = array<i64: 1, 32>}, {pipeline_mode = #tpu.pipeline_mode<synchronous>, transform_indices = @transform_8, window_bounds = array<i64: 32, 32>}, {pipeline_mode = #tpu.pipeline_mode<synchronous>, transform_indices = @transform_9, window_bounds = array<i64: 1, 32>}, {pipeline_mode = #tpu.pipeline_mode<synchronous>, transform_indices = @transform_10, window_bounds = array<i64: 32, 64>}, {pipeline_mode = #tpu.pipeline_mode<synchronous>, transform_indices = @transform_11, window_bounds = array<i64: 1, 64>}, {pipeline_mode = #tpu.pipeline_mode<synchronous>, transform_indices = @transform_12, window_bounds = array<i64: 32, 32>}, {pipeline_mode = #tpu.pipeline_mode<synchronous>, transform_indices = @transform_13, window_bounds = array<i64: 1, 32>}, {pipeline_mode = #tpu.pipeline_mode<synchronous>, transform_indices = @transform_14, window_bounds = array<i64: 32, 64>}, {pipeline_mode = #tpu.pipeline_mode<synchronous>, transform_indices = @transform_15, window_bounds = array<i64: 1, 64>}, {pipeline_mode = #tpu.pipeline_mode<synchronous>, transform_indices = @transform_16, window_bounds = array<i64: 64, 32>}, {pipeline_mode = #tpu.pipeline_mode<synchronous>, transform_indices = @transform_17, window_bounds = array<i64: 1, 32>}, {pipeline_mode = #tpu.pipeline_mode<synchronous>, transform_indices = @transform_18, window_bounds = array<i64: 1, 32>}, {pipeline_mode = #tpu.pipeline_mode<synchronous>, transform_indices = @transform_19, window_bounds = array<i64: 1, 32>}, {pipeline_mode = #tpu.pipeline_mode<synchronous>, transform_indices = @transform_20, window_bounds = array<i64: 1, 32>}, {pipeline_mode = #tpu.pipeline_mode<synchronous>, transform_indices = @transform_21, window_bounds = array<i64: 1, 32>}, {pipeline_mode = #tpu.pipeline_mode<synchronous>, transform_indices = @transform_22, window_bounds = array<i64: 1, 32>}, {pipeline_mode = #tpu.pipeline_mode<synchronous>, transform_indices = @transform_23, window_bounds = array<i64: 1, 32>}, {transform_indices = @transform_24, window_bounds = array<i64: 1, 8, 32>}, {transform_indices = @transform_25, window_bounds = array<i64: 1, 8, 32>}]} {
    %c0 = arith.constant 0 : index
    %c0_0 = arith.constant 0 : index
    %c0_1 = arith.constant 0 : index
    %0 = vector.load %arg1[%c0, %c0_0, %c0_1] : memref<1x8x32xf32, #tpu.memory_space<vmem>>, vector<1x8x32xf32>
    %1 = vector.shape_cast %0 : vector<1x8x32xf32> to vector<8x32xf32>
    %c0_2 = arith.constant 0 : index
    %c0_3 = arith.constant 0 : index
    %c0_4 = arith.constant 0 : index
    %2 = vector.load %arg2[%c0_2, %c0_3, %c0_4] : memref<1x8x32xf32, #tpu.memory_space<vmem>>, vector<1x8x32xf32>
    %3 = vector.shape_cast %2 : vector<1x8x32xf32> to vector<8x32xf32>
    %c0_5 = arith.constant 0 : index
    %c0_6 = arith.constant 0 : index
    %c0_7 = arith.constant 0 : index
    %4 = vector.load %arg3[%c0_5, %c0_6, %c0_7] : memref<1x1x8xf32, #tpu.memory_space<vmem>>, vector<1x1x8xf32>
    %5 = vector.shape_cast %4 : vector<1x1x8xf32> to vector<1x8xf32>
    %c0_8 = arith.constant 0 : index
    %c0_9 = arith.constant 0 : index
    %c0_10 = arith.constant 0 : index
    %6 = vector.load %arg4[%c0_8, %c0_9, %c0_10] : memref<1x1x8xf32, #tpu.memory_space<vmem>>, vector<1x1x8xf32>
    %7 = vector.shape_cast %6 : vector<1x1x8xf32> to vector<1x8xf32>
    %c0_11 = arith.constant 0 : index
    %c0_12 = arith.constant 0 : index
    %8 = vector.load %arg5[%c0_11, %c0_12] : memref<32x96xf32, #tpu.memory_space<vmem>>, vector<32x96xf32>
    %cst = arith.constant dense<0.000000e+00> : vector<8x96xf32>
    %9 = tpu.matmul %1, %8, %cst {dimension_numbers = #tpu.dot_dimension_numbers<[1], [0], [0], [1], [0, 0, 1, 1], [], []>} : vector<8x32xf32>, vector<32x96xf32>, vector<8x96xf32> -> vector<8x96xf32>
    %c0_13 = arith.constant 0 : index
    %c0_14 = arith.constant 0 : index
    %10 = vector.load %arg6[%c0_13, %c0_14] : memref<1x96xf32, #tpu.memory_space<vmem>>, vector<1x96xf32>
    %11 = vector.broadcast %10 : vector<1x96xf32> to vector<8x96xf32>
    %12 = arith.addf %9, %11 : vector<8x96xf32>
    %13 = vector.extract_strided_slice %12 {offsets = [0, 0], sizes = [8, 32], strides = [1, 1]} : vector<8x96xf32> to vector<8x32xf32>
    %14 = vector.extract_strided_slice %12 {offsets = [0, 32], sizes = [8, 32], strides = [1, 1]} : vector<8x96xf32> to vector<8x32xf32>
    %15 = vector.extract_strided_slice %12 {offsets = [0, 64], sizes = [8, 32], strides = [1, 1]} : vector<8x96xf32> to vector<8x32xf32>
    %c0_15 = arith.constant 0 : index
    %c0_16 = arith.constant 0 : index
    %16 = vector.load %arg8[%c0_15, %c0_16] : memref<1x32xf32, #tpu.memory_space<vmem>>, vector<1x32xf32>
    %cst_17 = arith.constant 0.000000e+00 : f32
    %17 = vector.broadcast %cst_17 : f32 to vector<8x32xf32>
    %18 = vector.extract_strided_slice %13 {offsets = [0, 0], sizes = [8, 8], strides = [1, 1]} : vector<8x32xf32> to vector<8x8xf32>
    %19 = vector.extract_strided_slice %14 {offsets = [0, 0], sizes = [8, 8], strides = [1, 1]} : vector<8x32xf32> to vector<8x8xf32>
    %20 = vector.extract_strided_slice %15 {offsets = [0, 0], sizes = [8, 8], strides = [1, 1]} : vector<8x32xf32> to vector<8x8xf32>
    %cst_18 = arith.constant dense<0.000000e+00> : vector<8x8xf32>
    %21 = tpu.matmul %18, %19, %cst_18 {dimension_numbers = #tpu.dot_dimension_numbers<[1], [1], [0], [0], [0, 0, 1, 0], [], []>} : vector<8x8xf32>, vector<8x8xf32>, vector<8x8xf32> -> vector<8x8xf32>
    %22 = vector.broadcast %5 : vector<1x8xf32> to vector<8x8xf32>
    %23 = arith.addf %21, %22 : vector<8x8xf32>
    %cst_19 = arith.constant dense<0xFF800000> : vector<8xf32>
    %24 = vector.multi_reduction <maximumf>, %23, %cst_19 [1] : vector<8x8xf32> to vector<8xf32>
    %25 = vector.shape_cast %24 : vector<8xf32> to vector<8x1xf32>
    %26 = vector.broadcast %25 : vector<8x1xf32> to vector<8x8xf32>
    %27 = arith.subf %23, %26 : vector<8x8xf32>
    %28 = math.exp %27 : vector<8x8xf32>
    %cst_20 = arith.constant dense<0.000000e+00> : vector<8xf32>
    %29 = vector.multi_reduction <add>, %28, %cst_20 [1] : vector<8x8xf32> to vector<8xf32>
    %30 = vector.shape_cast %29 : vector<8xf32> to vector<8x1xf32>
    %31 = tpu.reciprocal %30 : vector<8x1xf32> -> vector<8x1xf32>
    %32 = vector.broadcast %31 : vector<8x1xf32> to vector<8x8xf32>
    %33 = arith.mulf %28, %32 : vector<8x8xf32>
    %cst_21 = arith.constant dense<0.000000e+00> : vector<8x8xf32>
    %34 = tpu.matmul %33, %20, %cst_21 {dimension_numbers = #tpu.dot_dimension_numbers<[1], [0], [0], [1], [0, 0, 1, 1], [], []>} : vector<8x8xf32>, vector<8x8xf32>, vector<8x8xf32> -> vector<8x8xf32>
    %c0_22 = arith.constant 0 : index
    %c0_23 = arith.constant 0 : index
    %35 = vector.load %arg7[%c0_22, %c0_23] : memref<32x32xf32, #tpu.memory_space<vmem>>, vector<8x32xf32>
    %cst_24 = arith.constant dense<0.000000e+00> : vector<8x32xf32>
    %36 = tpu.matmul %34, %35, %cst_24 {dimension_numbers = #tpu.dot_dimension_numbers<[1], [0], [0], [1], [0, 0, 1, 1], [], []>} : vector<8x8xf32>, vector<8x32xf32>, vector<8x32xf32> -> vector<8x32xf32>
    %37 = arith.addf %17, %36 : vector<8x32xf32>
    %38 = vector.extract_strided_slice %13 {offsets = [0, 8], sizes = [8, 8], strides = [1, 1]} : vector<8x32xf32> to vector<8x8xf32>
    %39 = vector.extract_strided_slice %14 {offsets = [0, 8], sizes = [8, 8], strides = [1, 1]} : vector<8x32xf32> to vector<8x8xf32>
    %40 = vector.extract_strided_slice %15 {offsets = [0, 8], sizes = [8, 8], strides = [1, 1]} : vector<8x32xf32> to vector<8x8xf32>
    %cst_25 = arith.constant dense<0.000000e+00> : vector<8x8xf32>
    %41 = tpu.matmul %38, %39, %cst_25 {dimension_numbers = #tpu.dot_dimension_numbers<[1], [1], [0], [0], [0, 0, 1, 0], [], []>} : vector<8x8xf32>, vector<8x8xf32>, vector<8x8xf32> -> vector<8x8xf32>
    %42 = vector.broadcast %5 : vector<1x8xf32> to vector<8x8xf32>
    %43 = arith.addf %41, %42 : vector<8x8xf32>
    %cst_26 = arith.constant dense<0xFF800000> : vector<8xf32>
    %44 = vector.multi_reduction <maximumf>, %43, %cst_26 [1] : vector<8x8xf32> to vector<8xf32>
    %45 = vector.shape_cast %44 : vector<8xf32> to vector<8x1xf32>
    %46 = vector.broadcast %45 : vector<8x1xf32> to vector<8x8xf32>
    %47 = arith.subf %43, %46 : vector<8x8xf32>
    %48 = math.exp %47 : vector<8x8xf32>
    %cst_27 = arith.constant dense<0.000000e+00> : vector<8xf32>
    %49 = vector.multi_reduction <add>, %48, %cst_27 [1] : vector<8x8xf32> to vector<8xf32>
    %50 = vector.shape_cast %49 : vector<8xf32> to vector<8x1xf32>
    %51 = tpu.reciprocal %50 : vector<8x1xf32> -> vector<8x1xf32>
    %52 = vector.broadcast %51 : vector<8x1xf32> to vector<8x8xf32>
    %53 = arith.mulf %48, %52 : vector<8x8xf32>
    %cst_28 = arith.constant dense<0.000000e+00> : vector<8x8xf32>
    %54 = tpu.matmul %53, %40, %cst_28 {dimension_numbers = #tpu.dot_dimension_numbers<[1], [0], [0], [1], [0, 0, 1, 1], [], []>} : vector<8x8xf32>, vector<8x8xf32>, vector<8x8xf32> -> vector<8x8xf32>
    %c8 = arith.constant 8 : index
    %c0_29 = arith.constant 0 : index
    %55 = vector.load %arg7[%c8, %c0_29] : memref<32x32xf32, #tpu.memory_space<vmem>>, vector<8x32xf32>
    %cst_30 = arith.constant dense<0.000000e+00> : vector<8x32xf32>
    %56 = tpu.matmul %54, %55, %cst_30 {dimension_numbers = #tpu.dot_dimension_numbers<[1], [0], [0], [1], [0, 0, 1, 1], [], []>} : vector<8x8xf32>, vector<8x32xf32>, vector<8x32xf32> -> vector<8x32xf32>
    %57 = arith.addf %37, %56 : vector<8x32xf32>
    %58 = vector.extract_strided_slice %13 {offsets = [0, 16], sizes = [8, 8], strides = [1, 1]} : vector<8x32xf32> to vector<8x8xf32>
    %59 = vector.extract_strided_slice %14 {offsets = [0, 16], sizes = [8, 8], strides = [1, 1]} : vector<8x32xf32> to vector<8x8xf32>
    %60 = vector.extract_strided_slice %15 {offsets = [0, 16], sizes = [8, 8], strides = [1, 1]} : vector<8x32xf32> to vector<8x8xf32>
    %cst_31 = arith.constant dense<0.000000e+00> : vector<8x8xf32>
    %61 = tpu.matmul %58, %59, %cst_31 {dimension_numbers = #tpu.dot_dimension_numbers<[1], [1], [0], [0], [0, 0, 1, 0], [], []>} : vector<8x8xf32>, vector<8x8xf32>, vector<8x8xf32> -> vector<8x8xf32>
    %62 = vector.broadcast %5 : vector<1x8xf32> to vector<8x8xf32>
    %63 = arith.addf %61, %62 : vector<8x8xf32>
    %cst_32 = arith.constant dense<0xFF800000> : vector<8xf32>
    %64 = vector.multi_reduction <maximumf>, %63, %cst_32 [1] : vector<8x8xf32> to vector<8xf32>
    %65 = vector.shape_cast %64 : vector<8xf32> to vector<8x1xf32>
    %66 = vector.broadcast %65 : vector<8x1xf32> to vector<8x8xf32>
    %67 = arith.subf %63, %66 : vector<8x8xf32>
    %68 = math.exp %67 : vector<8x8xf32>
    %cst_33 = arith.constant dense<0.000000e+00> : vector<8xf32>
    %69 = vector.multi_reduction <add>, %68, %cst_33 [1] : vector<8x8xf32> to vector<8xf32>
    %70 = vector.shape_cast %69 : vector<8xf32> to vector<8x1xf32>
    %71 = tpu.reciprocal %70 : vector<8x1xf32> -> vector<8x1xf32>
    %72 = vector.broadcast %71 : vector<8x1xf32> to vector<8x8xf32>
    %73 = arith.mulf %68, %72 : vector<8x8xf32>
    %cst_34 = arith.constant dense<0.000000e+00> : vector<8x8xf32>
    %74 = tpu.matmul %73, %60, %cst_34 {dimension_numbers = #tpu.dot_dimension_numbers<[1], [0], [0], [1], [0, 0, 1, 1], [], []>} : vector<8x8xf32>, vector<8x8xf32>, vector<8x8xf32> -> vector<8x8xf32>
    %c16 = arith.constant 16 : index
    %c0_35 = arith.constant 0 : index
    %75 = vector.load %arg7[%c16, %c0_35] : memref<32x32xf32, #tpu.memory_space<vmem>>, vector<8x32xf32>
    %cst_36 = arith.constant dense<0.000000e+00> : vector<8x32xf32>
    %76 = tpu.matmul %74, %75, %cst_36 {dimension_numbers = #tpu.dot_dimension_numbers<[1], [0], [0], [1], [0, 0, 1, 1], [], []>} : vector<8x8xf32>, vector<8x32xf32>, vector<8x32xf32> -> vector<8x32xf32>
    %77 = arith.addf %57, %76 : vector<8x32xf32>
    %78 = vector.extract_strided_slice %13 {offsets = [0, 24], sizes = [8, 8], strides = [1, 1]} : vector<8x32xf32> to vector<8x8xf32>
    %79 = vector.extract_strided_slice %14 {offsets = [0, 24], sizes = [8, 8], strides = [1, 1]} : vector<8x32xf32> to vector<8x8xf32>
    %80 = vector.extract_strided_slice %15 {offsets = [0, 24], sizes = [8, 8], strides = [1, 1]} : vector<8x32xf32> to vector<8x8xf32>
    %cst_37 = arith.constant dense<0.000000e+00> : vector<8x8xf32>
    %81 = tpu.matmul %78, %79, %cst_37 {dimension_numbers = #tpu.dot_dimension_numbers<[1], [1], [0], [0], [0, 0, 1, 0], [], []>} : vector<8x8xf32>, vector<8x8xf32>, vector<8x8xf32> -> vector<8x8xf32>
    %82 = vector.broadcast %5 : vector<1x8xf32> to vector<8x8xf32>
    %83 = arith.addf %81, %82 : vector<8x8xf32>
    %cst_38 = arith.constant dense<0xFF800000> : vector<8xf32>
    %84 = vector.multi_reduction <maximumf>, %83, %cst_38 [1] : vector<8x8xf32> to vector<8xf32>
    %85 = vector.shape_cast %84 : vector<8xf32> to vector<8x1xf32>
    %86 = vector.broadcast %85 : vector<8x1xf32> to vector<8x8xf32>
    %87 = arith.subf %83, %86 : vector<8x8xf32>
    %88 = math.exp %87 : vector<8x8xf32>
    %cst_39 = arith.constant dense<0.000000e+00> : vector<8xf32>
    %89 = vector.multi_reduction <add>, %88, %cst_39 [1] : vector<8x8xf32> to vector<8xf32>
    %90 = vector.shape_cast %89 : vector<8xf32> to vector<8x1xf32>
    %91 = tpu.reciprocal %90 : vector<8x1xf32> -> vector<8x1xf32>
    %92 = vector.broadcast %91 : vector<8x1xf32> to vector<8x8xf32>
    %93 = arith.mulf %88, %92 : vector<8x8xf32>
    %cst_40 = arith.constant dense<0.000000e+00> : vector<8x8xf32>
    %94 = tpu.matmul %93, %80, %cst_40 {dimension_numbers = #tpu.dot_dimension_numbers<[1], [0], [0], [1], [0, 0, 1, 1], [], []>} : vector<8x8xf32>, vector<8x8xf32>, vector<8x8xf32> -> vector<8x8xf32>
    %c24 = arith.constant 24 : index
    %c0_41 = arith.constant 0 : index
    %95 = vector.load %arg7[%c24, %c0_41] : memref<32x32xf32, #tpu.memory_space<vmem>>, vector<8x32xf32>
    %cst_42 = arith.constant dense<0.000000e+00> : vector<8x32xf32>
    %96 = tpu.matmul %94, %95, %cst_42 {dimension_numbers = #tpu.dot_dimension_numbers<[1], [0], [0], [1], [0, 0, 1, 1], [], []>} : vector<8x8xf32>, vector<8x32xf32>, vector<8x32xf32> -> vector<8x32xf32>
    %97 = arith.addf %77, %96 : vector<8x32xf32>
    %98 = vector.broadcast %16 : vector<1x32xf32> to vector<8x32xf32>
    %99 = arith.addf %97, %98 : vector<8x32xf32>
    %100 = arith.addf %1, %99 : vector<8x32xf32>
    %c0_43 = arith.constant 0 : index
    %c0_44 = arith.constant 0 : index
    %101 = vector.load %arg19[%c0_43, %c0_44] : memref<1x32xf32, #tpu.memory_space<vmem>>, vector<1x32xf32>
    %c0_45 = arith.constant 0 : index
    %c0_46 = arith.constant 0 : index
    %102 = vector.load %arg20[%c0_45, %c0_46] : memref<1x32xf32, #tpu.memory_space<vmem>>, vector<1x32xf32>
    %cst_47 = arith.constant dense<0.000000e+00> : vector<8xf32>
    %103 = vector.multi_reduction <add>, %100, %cst_47 [1] : vector<8x32xf32> to vector<8xf32>
    %104 = vector.shape_cast %103 : vector<8xf32> to vector<8x1xf32>
    %cst_48 = arith.constant 3.200000e+01 : f32
    %105 = vector.broadcast %cst_48 : f32 to vector<8x1xf32>
    %106 = arith.divf %104, %105 : vector<8x1xf32>
    %107 = vector.broadcast %106 : vector<8x1xf32> to vector<8x32xf32>
    %108 = arith.subf %100, %107 : vector<8x32xf32>
    %109 = arith.mulf %108, %108 : vector<8x32xf32>
    %cst_49 = arith.constant dense<0.000000e+00> : vector<8xf32>
    %110 = vector.multi_reduction <add>, %109, %cst_49 [1] : vector<8x32xf32> to vector<8xf32>
    %111 = vector.shape_cast %110 : vector<8xf32> to vector<8x1xf32>
    %cst_50 = arith.constant 3.200000e+01 : f32
    %112 = vector.broadcast %cst_50 : f32 to vector<8x1xf32>
    %113 = arith.divf %111, %112 : vector<8x1xf32>
    %cst_51 = arith.constant 9.99999974E-6 : f32
    %114 = vector.broadcast %cst_51 : f32 to vector<8x1xf32>
    %115 = arith.addf %113, %114 : vector<8x1xf32>
    %116 = math.rsqrt %115 : vector<8x1xf32>
    %117 = vector.broadcast %116 : vector<8x1xf32> to vector<8x32xf32>
    %118 = arith.mulf %108, %117 : vector<8x32xf32>
    %119 = vector.broadcast %101 : vector<1x32xf32> to vector<8x32xf32>
    %120 = arith.mulf %118, %119 : vector<8x32xf32>
    %121 = vector.broadcast %102 : vector<1x32xf32> to vector<8x32xf32>
    %122 = arith.addf %120, %121 : vector<8x32xf32>
    %c0_52 = arith.constant 0 : index
    %c0_53 = arith.constant 0 : index
    %123 = vector.load %arg9[%c0_52, %c0_53] : memref<32x32xf32, #tpu.memory_space<vmem>>, vector<32x32xf32>
    %cst_54 = arith.constant dense<0.000000e+00> : vector<8x32xf32>
    %124 = tpu.matmul %122, %123, %cst_54 {dimension_numbers = #tpu.dot_dimension_numbers<[1], [0], [0], [1], [0, 0, 1, 1], [], []>} : vector<8x32xf32>, vector<32x32xf32>, vector<8x32xf32> -> vector<8x32xf32>
    %c0_55 = arith.constant 0 : index
    %c0_56 = arith.constant 0 : index
    %125 = vector.load %arg10[%c0_55, %c0_56] : memref<1x32xf32, #tpu.memory_space<vmem>>, vector<1x32xf32>
    %126 = vector.broadcast %125 : vector<1x32xf32> to vector<8x32xf32>
    %127 = arith.addf %124, %126 : vector<8x32xf32>
    %c0_57 = arith.constant 0 : index
    %c0_58 = arith.constant 0 : index
    %128 = vector.load %arg11[%c0_57, %c0_58] : memref<32x64xf32, #tpu.memory_space<vmem>>, vector<32x64xf32>
    %cst_59 = arith.constant dense<0.000000e+00> : vector<8x64xf32>
    %129 = tpu.matmul %3, %128, %cst_59 {dimension_numbers = #tpu.dot_dimension_numbers<[1], [0], [0], [1], [0, 0, 1, 1], [], []>} : vector<8x32xf32>, vector<32x64xf32>, vector<8x64xf32> -> vector<8x64xf32>
    %c0_60 = arith.constant 0 : index
    %c0_61 = arith.constant 0 : index
    %130 = vector.load %arg12[%c0_60, %c0_61] : memref<1x64xf32, #tpu.memory_space<vmem>>, vector<1x64xf32>
    %131 = vector.broadcast %130 : vector<1x64xf32> to vector<8x64xf32>
    %132 = arith.addf %129, %131 : vector<8x64xf32>
    %133 = vector.extract_strided_slice %132 {offsets = [0, 0], sizes = [8, 32], strides = [1, 1]} : vector<8x64xf32> to vector<8x32xf32>
    %134 = vector.extract_strided_slice %132 {offsets = [0, 32], sizes = [8, 32], strides = [1, 1]} : vector<8x64xf32> to vector<8x32xf32>
    %c0_62 = arith.constant 0 : index
    %c0_63 = arith.constant 0 : index
    %135 = vector.load %arg14[%c0_62, %c0_63] : memref<1x32xf32, #tpu.memory_space<vmem>>, vector<1x32xf32>
    %cst_64 = arith.constant 0.000000e+00 : f32
    %136 = vector.broadcast %cst_64 : f32 to vector<8x32xf32>
    %137 = vector.extract_strided_slice %127 {offsets = [0, 0], sizes = [8, 8], strides = [1, 1]} : vector<8x32xf32> to vector<8x8xf32>
    %138 = vector.extract_strided_slice %133 {offsets = [0, 0], sizes = [8, 8], strides = [1, 1]} : vector<8x32xf32> to vector<8x8xf32>
    %139 = vector.extract_strided_slice %134 {offsets = [0, 0], sizes = [8, 8], strides = [1, 1]} : vector<8x32xf32> to vector<8x8xf32>
    %cst_65 = arith.constant dense<0.000000e+00> : vector<8x8xf32>
    %140 = tpu.matmul %137, %138, %cst_65 {dimension_numbers = #tpu.dot_dimension_numbers<[1], [1], [0], [0], [0, 0, 1, 0], [], []>} : vector<8x8xf32>, vector<8x8xf32>, vector<8x8xf32> -> vector<8x8xf32>
    %141 = vector.broadcast %7 : vector<1x8xf32> to vector<8x8xf32>
    %142 = arith.addf %140, %141 : vector<8x8xf32>
    %cst_66 = arith.constant dense<0xFF800000> : vector<8xf32>
    %143 = vector.multi_reduction <maximumf>, %142, %cst_66 [1] : vector<8x8xf32> to vector<8xf32>
    %144 = vector.shape_cast %143 : vector<8xf32> to vector<8x1xf32>
    %145 = vector.broadcast %144 : vector<8x1xf32> to vector<8x8xf32>
    %146 = arith.subf %142, %145 : vector<8x8xf32>
    %147 = math.exp %146 : vector<8x8xf32>
    %cst_67 = arith.constant dense<0.000000e+00> : vector<8xf32>
    %148 = vector.multi_reduction <add>, %147, %cst_67 [1] : vector<8x8xf32> to vector<8xf32>
    %149 = vector.shape_cast %148 : vector<8xf32> to vector<8x1xf32>
    %150 = tpu.reciprocal %149 : vector<8x1xf32> -> vector<8x1xf32>
    %151 = vector.broadcast %150 : vector<8x1xf32> to vector<8x8xf32>
    %152 = arith.mulf %147, %151 : vector<8x8xf32>
    %cst_68 = arith.constant dense<0.000000e+00> : vector<8x8xf32>
    %153 = tpu.matmul %152, %139, %cst_68 {dimension_numbers = #tpu.dot_dimension_numbers<[1], [0], [0], [1], [0, 0, 1, 1], [], []>} : vector<8x8xf32>, vector<8x8xf32>, vector<8x8xf32> -> vector<8x8xf32>
    %c0_69 = arith.constant 0 : index
    %c0_70 = arith.constant 0 : index
    %154 = vector.load %arg13[%c0_69, %c0_70] : memref<32x32xf32, #tpu.memory_space<vmem>>, vector<8x32xf32>
    %cst_71 = arith.constant dense<0.000000e+00> : vector<8x32xf32>
    %155 = tpu.matmul %153, %154, %cst_71 {dimension_numbers = #tpu.dot_dimension_numbers<[1], [0], [0], [1], [0, 0, 1, 1], [], []>} : vector<8x8xf32>, vector<8x32xf32>, vector<8x32xf32> -> vector<8x32xf32>
    %156 = arith.addf %136, %155 : vector<8x32xf32>
    %157 = vector.extract_strided_slice %127 {offsets = [0, 8], sizes = [8, 8], strides = [1, 1]} : vector<8x32xf32> to vector<8x8xf32>
    %158 = vector.extract_strided_slice %133 {offsets = [0, 8], sizes = [8, 8], strides = [1, 1]} : vector<8x32xf32> to vector<8x8xf32>
    %159 = vector.extract_strided_slice %134 {offsets = [0, 8], sizes = [8, 8], strides = [1, 1]} : vector<8x32xf32> to vector<8x8xf32>
    %cst_72 = arith.constant dense<0.000000e+00> : vector<8x8xf32>
    %160 = tpu.matmul %157, %158, %cst_72 {dimension_numbers = #tpu.dot_dimension_numbers<[1], [1], [0], [0], [0, 0, 1, 0], [], []>} : vector<8x8xf32>, vector<8x8xf32>, vector<8x8xf32> -> vector<8x8xf32>
    %161 = vector.broadcast %7 : vector<1x8xf32> to vector<8x8xf32>
    %162 = arith.addf %160, %161 : vector<8x8xf32>
    %cst_73 = arith.constant dense<0xFF800000> : vector<8xf32>
    %163 = vector.multi_reduction <maximumf>, %162, %cst_73 [1] : vector<8x8xf32> to vector<8xf32>
    %164 = vector.shape_cast %163 : vector<8xf32> to vector<8x1xf32>
    %165 = vector.broadcast %164 : vector<8x1xf32> to vector<8x8xf32>
    %166 = arith.subf %162, %165 : vector<8x8xf32>
    %167 = math.exp %166 : vector<8x8xf32>
    %cst_74 = arith.constant dense<0.000000e+00> : vector<8xf32>
    %168 = vector.multi_reduction <add>, %167, %cst_74 [1] : vector<8x8xf32> to vector<8xf32>
    %169 = vector.shape_cast %168 : vector<8xf32> to vector<8x1xf32>
    %170 = tpu.reciprocal %169 : vector<8x1xf32> -> vector<8x1xf32>
    %171 = vector.broadcast %170 : vector<8x1xf32> to vector<8x8xf32>
    %172 = arith.mulf %167, %171 : vector<8x8xf32>
    %cst_75 = arith.constant dense<0.000000e+00> : vector<8x8xf32>
    %173 = tpu.matmul %172, %159, %cst_75 {dimension_numbers = #tpu.dot_dimension_numbers<[1], [0], [0], [1], [0, 0, 1, 1], [], []>} : vector<8x8xf32>, vector<8x8xf32>, vector<8x8xf32> -> vector<8x8xf32>
    %c8_76 = arith.constant 8 : index
    %c0_77 = arith.constant 0 : index
    %174 = vector.load %arg13[%c8_76, %c0_77] : memref<32x32xf32, #tpu.memory_space<vmem>>, vector<8x32xf32>
    %cst_78 = arith.constant dense<0.000000e+00> : vector<8x32xf32>
    %175 = tpu.matmul %173, %174, %cst_78 {dimension_numbers = #tpu.dot_dimension_numbers<[1], [0], [0], [1], [0, 0, 1, 1], [], []>} : vector<8x8xf32>, vector<8x32xf32>, vector<8x32xf32> -> vector<8x32xf32>
    %176 = arith.addf %156, %175 : vector<8x32xf32>
    %177 = vector.extract_strided_slice %127 {offsets = [0, 16], sizes = [8, 8], strides = [1, 1]} : vector<8x32xf32> to vector<8x8xf32>
    %178 = vector.extract_strided_slice %133 {offsets = [0, 16], sizes = [8, 8], strides = [1, 1]} : vector<8x32xf32> to vector<8x8xf32>
    %179 = vector.extract_strided_slice %134 {offsets = [0, 16], sizes = [8, 8], strides = [1, 1]} : vector<8x32xf32> to vector<8x8xf32>
    %cst_79 = arith.constant dense<0.000000e+00> : vector<8x8xf32>
    %180 = tpu.matmul %177, %178, %cst_79 {dimension_numbers = #tpu.dot_dimension_numbers<[1], [1], [0], [0], [0, 0, 1, 0], [], []>} : vector<8x8xf32>, vector<8x8xf32>, vector<8x8xf32> -> vector<8x8xf32>
    %181 = vector.broadcast %7 : vector<1x8xf32> to vector<8x8xf32>
    %182 = arith.addf %180, %181 : vector<8x8xf32>
    %cst_80 = arith.constant dense<0xFF800000> : vector<8xf32>
    %183 = vector.multi_reduction <maximumf>, %182, %cst_80 [1] : vector<8x8xf32> to vector<8xf32>
    %184 = vector.shape_cast %183 : vector<8xf32> to vector<8x1xf32>
    %185 = vector.broadcast %184 : vector<8x1xf32> to vector<8x8xf32>
    %186 = arith.subf %182, %185 : vector<8x8xf32>
    %187 = math.exp %186 : vector<8x8xf32>
    %cst_81 = arith.constant dense<0.000000e+00> : vector<8xf32>
    %188 = vector.multi_reduction <add>, %187, %cst_81 [1] : vector<8x8xf32> to vector<8xf32>
    %189 = vector.shape_cast %188 : vector<8xf32> to vector<8x1xf32>
    %190 = tpu.reciprocal %189 : vector<8x1xf32> -> vector<8x1xf32>
    %191 = vector.broadcast %190 : vector<8x1xf32> to vector<8x8xf32>
    %192 = arith.mulf %187, %191 : vector<8x8xf32>
    %cst_82 = arith.constant dense<0.000000e+00> : vector<8x8xf32>
    %193 = tpu.matmul %192, %179, %cst_82 {dimension_numbers = #tpu.dot_dimension_numbers<[1], [0], [0], [1], [0, 0, 1, 1], [], []>} : vector<8x8xf32>, vector<8x8xf32>, vector<8x8xf32> -> vector<8x8xf32>
    %c16_83 = arith.constant 16 : index
    %c0_84 = arith.constant 0 : index
    %194 = vector.load %arg13[%c16_83, %c0_84] : memref<32x32xf32, #tpu.memory_space<vmem>>, vector<8x32xf32>
    %cst_85 = arith.constant dense<0.000000e+00> : vector<8x32xf32>
    %195 = tpu.matmul %193, %194, %cst_85 {dimension_numbers = #tpu.dot_dimension_numbers<[1], [0], [0], [1], [0, 0, 1, 1], [], []>} : vector<8x8xf32>, vector<8x32xf32>, vector<8x32xf32> -> vector<8x32xf32>
    %196 = arith.addf %176, %195 : vector<8x32xf32>
    %197 = vector.extract_strided_slice %127 {offsets = [0, 24], sizes = [8, 8], strides = [1, 1]} : vector<8x32xf32> to vector<8x8xf32>
    %198 = vector.extract_strided_slice %133 {offsets = [0, 24], sizes = [8, 8], strides = [1, 1]} : vector<8x32xf32> to vector<8x8xf32>
    %199 = vector.extract_strided_slice %134 {offsets = [0, 24], sizes = [8, 8], strides = [1, 1]} : vector<8x32xf32> to vector<8x8xf32>
    %cst_86 = arith.constant dense<0.000000e+00> : vector<8x8xf32>
    %200 = tpu.matmul %197, %198, %cst_86 {dimension_numbers = #tpu.dot_dimension_numbers<[1], [1], [0], [0], [0, 0, 1, 0], [], []>} : vector<8x8xf32>, vector<8x8xf32>, vector<8x8xf32> -> vector<8x8xf32>
    %201 = vector.broadcast %7 : vector<1x8xf32> to vector<8x8xf32>
    %202 = arith.addf %200, %201 : vector<8x8xf32>
    %cst_87 = arith.constant dense<0xFF800000> : vector<8xf32>
    %203 = vector.multi_reduction <maximumf>, %202, %cst_87 [1] : vector<8x8xf32> to vector<8xf32>
    %204 = vector.shape_cast %203 : vector<8xf32> to vector<8x1xf32>
    %205 = vector.broadcast %204 : vector<8x1xf32> to vector<8x8xf32>
    %206 = arith.subf %202, %205 : vector<8x8xf32>
    %207 = math.exp %206 : vector<8x8xf32>
    %cst_88 = arith.constant dense<0.000000e+00> : vector<8xf32>
    %208 = vector.multi_reduction <add>, %207, %cst_88 [1] : vector<8x8xf32> to vector<8xf32>
    %209 = vector.shape_cast %208 : vector<8xf32> to vector<8x1xf32>
    %210 = tpu.reciprocal %209 : vector<8x1xf32> -> vector<8x1xf32>
    %211 = vector.broadcast %210 : vector<8x1xf32> to vector<8x8xf32>
    %212 = arith.mulf %207, %211 : vector<8x8xf32>
    %cst_89 = arith.constant dense<0.000000e+00> : vector<8x8xf32>
    %213 = tpu.matmul %212, %199, %cst_89 {dimension_numbers = #tpu.dot_dimension_numbers<[1], [0], [0], [1], [0, 0, 1, 1], [], []>} : vector<8x8xf32>, vector<8x8xf32>, vector<8x8xf32> -> vector<8x8xf32>
    %c24_90 = arith.constant 24 : index
    %c0_91 = arith.constant 0 : index
    %214 = vector.load %arg13[%c24_90, %c0_91] : memref<32x32xf32, #tpu.memory_space<vmem>>, vector<8x32xf32>
    %cst_92 = arith.constant dense<0.000000e+00> : vector<8x32xf32>
    %215 = tpu.matmul %213, %214, %cst_92 {dimension_numbers = #tpu.dot_dimension_numbers<[1], [0], [0], [1], [0, 0, 1, 1], [], []>} : vector<8x8xf32>, vector<8x32xf32>, vector<8x32xf32> -> vector<8x32xf32>
    %216 = arith.addf %196, %215 : vector<8x32xf32>
    %217 = vector.broadcast %135 : vector<1x32xf32> to vector<8x32xf32>
    %218 = arith.addf %216, %217 : vector<8x32xf32>
    %219 = tpu.concatenate %152, %172, %192, %212 in 1 : vector<8x8xf32>, vector<8x8xf32>, vector<8x8xf32>, vector<8x8xf32> -> vector<8x32xf32>
    %c0_93 = arith.constant 0 : index
    %c0_94 = arith.constant 0 : index
    %c0_95 = arith.constant 0 : index
    %220 = vector.load %arg26[%c0_93, %c0_94, %c0_95] : memref<1x8x32xf32, #tpu.memory_space<vmem>>, vector<1x8x32xf32>
    %221 = vector.shape_cast %220 : vector<1x8x32xf32> to vector<8x32xf32>
    %222 = vector.shape_cast %219 : vector<8x32xf32> to vector<1x8x32xf32>
    tpu.vector_store %arg26[%c0_93, %c0_94, %c0_95], %222 {strides = array<i32>} : memref<1x8x32xf32, #tpu.memory_space<vmem>>, vector<1x8x32xf32>,
    %223 = arith.addf %122, %218 : vector<8x32xf32>
    %c0_96 = arith.constant 0 : index
    %c0_97 = arith.constant 0 : index
    %224 = vector.load %arg21[%c0_96, %c0_97] : memref<1x32xf32, #tpu.memory_space<vmem>>, vector<1x32xf32>
    %c0_98 = arith.constant 0 : index
    %c0_99 = arith.constant 0 : index
    %225 = vector.load %arg22[%c0_98, %c0_99] : memref<1x32xf32, #tpu.memory_space<vmem>>, vector<1x32xf32>
    %cst_100 = arith.constant dense<0.000000e+00> : vector<8xf32>
    %226 = vector.multi_reduction <add>, %223, %cst_100 [1] : vector<8x32xf32> to vector<8xf32>
    %227 = vector.shape_cast %226 : vector<8xf32> to vector<8x1xf32>
    %cst_101 = arith.constant 3.200000e+01 : f32
    %228 = vector.broadcast %cst_101 : f32 to vector<8x1xf32>
    %229 = arith.divf %227, %228 : vector<8x1xf32>
    %230 = vector.broadcast %229 : vector<8x1xf32> to vector<8x32xf32>
    %231 = arith.subf %223, %230 : vector<8x32xf32>
    %232 = arith.mulf %231, %231 : vector<8x32xf32>
    %cst_102 = arith.constant dense<0.000000e+00> : vector<8xf32>
    %233 = vector.multi_reduction <add>, %232, %cst_102 [1] : vector<8x32xf32> to vector<8xf32>
    %234 = vector.shape_cast %233 : vector<8xf32> to vector<8x1xf32>
    %cst_103 = arith.constant 3.200000e+01 : f32
    %235 = vector.broadcast %cst_103 : f32 to vector<8x1xf32>
    %236 = arith.divf %234, %235 : vector<8x1xf32>
    %cst_104 = arith.constant 9.99999974E-6 : f32
    %237 = vector.broadcast %cst_104 : f32 to vector<8x1xf32>
    %238 = arith.addf %236, %237 : vector<8x1xf32>
    %239 = math.rsqrt %238 : vector<8x1xf32>
    %240 = vector.broadcast %239 : vector<8x1xf32> to vector<8x32xf32>
    %241 = arith.mulf %231, %240 : vector<8x32xf32>
    %242 = vector.broadcast %224 : vector<1x32xf32> to vector<8x32xf32>
    %243 = arith.mulf %241, %242 : vector<8x32xf32>
    %244 = vector.broadcast %225 : vector<1x32xf32> to vector<8x32xf32>
    %245 = arith.addf %243, %244 : vector<8x32xf32>
    %c0_105 = arith.constant 0 : index
    %c0_106 = arith.constant 0 : index
    %246 = vector.load %arg15[%c0_105, %c0_106] : memref<32x64xf32, #tpu.memory_space<vmem>>, vector<32x64xf32>
    %cst_107 = arith.constant dense<0.000000e+00> : vector<8x64xf32>
    %247 = tpu.matmul %245, %246, %cst_107 {dimension_numbers = #tpu.dot_dimension_numbers<[1], [0], [0], [1], [0, 0, 1, 1], [], []>} : vector<8x32xf32>, vector<32x64xf32>, vector<8x64xf32> -> vector<8x64xf32>
    %c0_108 = arith.constant 0 : index
    %c0_109 = arith.constant 0 : index
    %248 = vector.load %arg16[%c0_108, %c0_109] : memref<1x64xf32, #tpu.memory_space<vmem>>, vector<1x64xf32>
    %249 = vector.broadcast %248 : vector<1x64xf32> to vector<8x64xf32>
    %250 = arith.addf %247, %249 : vector<8x64xf32>
    %cst_110 = arith.constant 0.000000e+00 : f32
    %251 = vector.broadcast %cst_110 : f32 to vector<8x64xf32>
    %252 = arith.maximumf %250, %251 : vector<8x64xf32>
    %c0_111 = arith.constant 0 : index
    %c0_112 = arith.constant 0 : index
    %253 = vector.load %arg17[%c0_111, %c0_112] : memref<64x32xf32, #tpu.memory_space<vmem>>, vector<64x32xf32>
    %cst_113 = arith.constant dense<0.000000e+00> : vector<8x32xf32>
    %254 = tpu.matmul %252, %253, %cst_113 {dimension_numbers = #tpu.dot_dimension_numbers<[1], [0], [0], [1], [0, 0, 1, 1], [], []>} : vector<8x64xf32>, vector<64x32xf32>, vector<8x32xf32> -> vector<8x32xf32>
    %c0_114 = arith.constant 0 : index
    %c0_115 = arith.constant 0 : index
    %255 = vector.load %arg18[%c0_114, %c0_115] : memref<1x32xf32, #tpu.memory_space<vmem>>, vector<1x32xf32>
    %256 = vector.broadcast %255 : vector<1x32xf32> to vector<8x32xf32>
    %257 = arith.addf %254, %256 : vector<8x32xf32>
    %258 = arith.addf %245, %257 : vector<8x32xf32>
    %c0_116 = arith.constant 0 : index
    %c0_117 = arith.constant 0 : index
    %259 = vector.load %arg23[%c0_116, %c0_117] : memref<1x32xf32, #tpu.memory_space<vmem>>, vector<1x32xf32>
    %c0_118 = arith.constant 0 : index
    %c0_119 = arith.constant 0 : index
    %260 = vector.load %arg24[%c0_118, %c0_119] : memref<1x32xf32, #tpu.memory_space<vmem>>, vector<1x32xf32>
    %cst_120 = arith.constant dense<0.000000e+00> : vector<8xf32>
    %261 = vector.multi_reduction <add>, %258, %cst_120 [1] : vector<8x32xf32> to vector<8xf32>
    %262 = vector.shape_cast %261 : vector<8xf32> to vector<8x1xf32>
    %cst_121 = arith.constant 3.200000e+01 : f32
    %263 = vector.broadcast %cst_121 : f32 to vector<8x1xf32>
    %264 = arith.divf %262, %263 : vector<8x1xf32>
    %265 = vector.broadcast %264 : vector<8x1xf32> to vector<8x32xf32>
    %266 = arith.subf %258, %265 : vector<8x32xf32>
    %267 = arith.mulf %266, %266 : vector<8x32xf32>
    %cst_122 = arith.constant dense<0.000000e+00> : vector<8xf32>
    %268 = vector.multi_reduction <add>, %267, %cst_122 [1] : vector<8x32xf32> to vector<8xf32>
    %269 = vector.shape_cast %268 : vector<8xf32> to vector<8x1xf32>
    %cst_123 = arith.constant 3.200000e+01 : f32
    %270 = vector.broadcast %cst_123 : f32 to vector<8x1xf32>
    %271 = arith.divf %269, %270 : vector<8x1xf32>
    %cst_124 = arith.constant 9.99999974E-6 : f32
    %272 = vector.broadcast %cst_124 : f32 to vector<8x1xf32>
    %273 = arith.addf %271, %272 : vector<8x1xf32>
    %274 = math.rsqrt %273 : vector<8x1xf32>
    %275 = vector.broadcast %274 : vector<8x1xf32> to vector<8x32xf32>
    %276 = arith.mulf %266, %275 : vector<8x32xf32>
    %277 = vector.broadcast %259 : vector<1x32xf32> to vector<8x32xf32>
    %278 = arith.mulf %276, %277 : vector<8x32xf32>
    %279 = vector.broadcast %260 : vector<1x32xf32> to vector<8x32xf32>
    %280 = arith.addf %278, %279 : vector<8x32xf32>
    %c0_125 = arith.constant 0 : index
    %c0_126 = arith.constant 0 : index
    %c0_127 = arith.constant 0 : index
    %281 = vector.load %arg25[%c0_125, %c0_126, %c0_127] : memref<1x8x32xf32, #tpu.memory_space<vmem>>, vector<1x8x32xf32>
    %282 = vector.shape_cast %281 : vector<1x8x32xf32> to vector<8x32xf32>
    %283 = vector.shape_cast %280 : vector<8x32xf32> to vector<1x8x32xf32>
    tpu.vector_store %arg25[%c0_125, %c0_126, %c0_127], %283 {strides = array<i32>} : memref<1x8x32xf32, #tpu.memory_space<vmem>>, vector<1x8x32xf32>,
    return
  }
  func.func @transform_0(%arg0: i32) -> (i32, i32, i32) {
    %c0_i32 = arith.constant 0 : i32
    %c0_i32_0 = arith.constant 0 : i32
    %c0_i32_1 = arith.constant 0 : i32
    return %arg0, %c0_i32, %c0_i32_0 : i32, i32, i32
  }
  func.func @transform_1(%arg0: i32) -> (i32, i32, i32) {
    %c0_i32 = arith.constant 0 : i32
    %c0_i32_0 = arith.constant 0 : i32
    %c0_i32_1 = arith.constant 0 : i32
    return %arg0, %c0_i32, %c0_i32_0 : i32, i32, i32
  }
  func.func @transform_2(%arg0: i32) -> (i32, i32, i32) {
    %c0_i32 = arith.constant 0 : i32
    %c0_i32_0 = arith.constant 0 : i32
    %c0_i32_1 = arith.constant 0 : i32
    return %arg0, %c0_i32, %c0_i32_0 : i32, i32, i32
  }
  func.func @transform_3(%arg0: i32) -> (i32, i32, i32) {
    %c0_i32 = arith.constant 0 : i32
    %c0_i32_0 = arith.constant 0 : i32
    %c0_i32_1 = arith.constant 0 : i32
    return %arg0, %c0_i32, %c0_i32_0 : i32, i32, i32
  }
  func.func @transform_4(%arg0: i32) -> (i32, i32) {
    %c0_i32 = arith.constant 0 : i32
    %c0_i32_0 = arith.constant 0 : i32
    %c0_i32_1 = arith.constant 0 : i32
    return %c0_i32, %c0_i32_0 : i32, i32
  }
  func.func @transform_5(%arg0: i32) -> (i32, i32) {
    %c0_i32 = arith.constant 0 : i32
    %c0_i32_0 = arith.constant 0 : i32
    %c0_i32_1 = arith.constant 0 : i32
    return %c0_i32, %c0_i32_0 : i32, i32
  }
  func.func @transform_6(%arg0: i32) -> (i32, i32) {
    %c0_i32 = arith.constant 0 : i32
    %c0_i32_0 = arith.constant 0 : i32
    %c0_i32_1 = arith.constant 0 : i32
    return %c0_i32, %c0_i32_0 : i32, i32
  }
  func.func @transform_7(%arg0: i32) -> (i32, i32) {
    %c0_i32 = arith.constant 0 : i32
    %c0_i32_0 = arith.constant 0 : i32
    %c0_i32_1 = arith.constant 0 : i32
    return %c0_i32, %c0_i32_0 : i32, i32
  }
  func.func @transform_8(%arg0: i32) -> (i32, i32) {
    %c0_i32 = arith.constant 0 : i32
    %c0_i32_0 = arith.constant 0 : i32
    %c0_i32_1 = arith.constant 0 : i32
    return %c0_i32, %c0_i32_0 : i32, i32
  }
  func.func @transform_9(%arg0: i32) -> (i32, i32) {
    %c0_i32 = arith.constant 0 : i32
    %c0_i32_0 = arith.constant 0 : i32
    %c0_i32_1 = arith.constant 0 : i32
    return %c0_i32, %c0_i32_0 : i32, i32
  }
  func.func @transform_10(%arg0: i32) -> (i32, i32) {
    %c0_i32 = arith.constant 0 : i32
    %c0_i32_0 = arith.constant 0 : i32
    %c0_i32_1 = arith.constant 0 : i32
    return %c0_i32, %c0_i32_0 : i32, i32
  }
  func.func @transform_11(%arg0: i32) -> (i32, i32) {
    %c0_i32 = arith.constant 0 : i32
    %c0_i32_0 = arith.constant 0 : i32
    %c0_i32_1 = arith.constant 0 : i32
    return %c0_i32, %c0_i32_0 : i32, i32
  }
  func.func @transform_12(%arg0: i32) -> (i32, i32) {
    %c0_i32 = arith.constant 0 : i32
    %c0_i32_0 = arith.constant 0 : i32
    %c0_i32_1 = arith.constant 0 : i32
    return %c0_i32, %c0_i32_0 : i32, i32
  }
  func.func @transform_13(%arg0: i32) -> (i32, i32) {
    %c0_i32 = arith.constant 0 : i32
    %c0_i32_0 = arith.constant 0 : i32
    %c0_i32_1 = arith.constant 0 : i32
    return %c0_i32, %c0_i32_0 : i32, i32
  }
  func.func @transform_14(%arg0: i32) -> (i32, i32) {
    %c0_i32 = arith.constant 0 : i32
    %c0_i32_0 = arith.constant 0 : i32
    %c0_i32_1 = arith.constant 0 : i32
    return %c0_i32, %c0_i32_0 : i32, i32
  }
  func.func @transform_15(%arg0: i32) -> (i32, i32) {
    %c0_i32 = arith.constant 0 : i32
    %c0_i32_0 = arith.constant 0 : i32
    %c0_i32_1 = arith.constant 0 : i32
    return %c0_i32, %c0_i32_0 : i32, i32
  }
  func.func @transform_16(%arg0: i32) -> (i32, i32) {
    %c0_i32 = arith.constant 0 : i32
    %c0_i32_0 = arith.constant 0 : i32
    %c0_i32_1 = arith.constant 0 : i32
    return %c0_i32, %c0_i32_0 : i32, i32
  }
  func.func @transform_17(%arg0: i32) -> (i32, i32) {
    %c0_i32 = arith.constant 0 : i32
    %c0_i32_0 = arith.constant 0 : i32
    %c0_i32_1 = arith.constant 0 : i32
    return %c0_i32, %c0_i32_0 : i32, i32
  }
  func.func @transform_18(%arg0: i32) -> (i32, i32) {
    %c0_i32 = arith.constant 0 : i32
    %c0_i32_0 = arith.constant 0 : i32
    %c0_i32_1 = arith.constant 0 : i32
    return %c0_i32, %c0_i32_0 : i32, i32
  }
  func.func @transform_19(%arg0: i32) -> (i32, i32) {
    %c0_i32 = arith.constant 0 : i32
    %c0_i32_0 = arith.constant 0 : i32
    %c0_i32_1 = arith.constant 0 : i32
    return %c0_i32, %c0_i32_0 : i32, i32
  }
  func.func @transform_20(%arg0: i32) -> (i32, i32) {
    %c0_i32 = arith.constant 0 : i32
    %c0_i32_0 = arith.constant 0 : i32
    %c0_i32_1 = arith.constant 0 : i32
    return %c0_i32, %c0_i32_0 : i32, i32
  }
  func.func @transform_21(%arg0: i32) -> (i32, i32) {
    %c0_i32 = arith.constant 0 : i32
    %c0_i32_0 = arith.constant 0 : i32
    %c0_i32_1 = arith.constant 0 : i32
    return %c0_i32, %c0_i32_0 : i32, i32
  }
  func.func @transform_22(%arg0: i32) -> (i32, i32) {
    %c0_i32 = arith.constant 0 : i32
    %c0_i32_0 = arith.constant 0 : i32
    %c0_i32_1 = arith.constant 0 : i32
    return %c0_i32, %c0_i32_0 : i32, i32
  }
  func.func @transform_23(%arg0: i32) -> (i32, i32) {
    %c0_i32 = arith.constant 0 : i32
    %c0_i32_0 = arith.constant 0 : i32
    %c0_i32_1 = arith.constant 0 : i32
    return %c0_i32, %c0_i32_0 : i32, i32
  }
  func.func @transform_24(%arg0: i32) -> (i32, i32, i32) {
    %c0_i32 = arith.constant 0 : i32
    %c0_i32_0 = arith.constant 0 : i32
    %c0_i32_1 = arith.constant 0 : i32
    return %arg0, %c0_i32, %c0_i32_0 : i32, i32, i32
  }
  func.func @transform_25(%arg0: i32) -> (i32, i32, i32) {
    %c0_i32 = arith.constant 0 : i32
    %c0_i32_0 = arith.constant 0 : i32
    %c0_i32_1 = arith.constant 0 : i32
    return %arg0, %c0_i32, %c0_i32_0 : i32, i32, i32
  }
}

</mosaic_0001>

<llo_original>
// kernel: tpu_custom_call.1
$region0: #{tpu_custom_call.1}
  #allocation0 [shape = 'u32[]', space=smem, size = 0x4, offset = 0x4, fixed_abs, tag = 'smem constant byte address 0x4 - core index']
  #allocation1 [shape = 'u32[72,128]{1,0:T(1,128)}', space=vmem, size = 0x9000, scoped, tag = 'internal scratch']
  %s0 = inlined_call_operand.hbm [shape: f32[2,8,32], index: 0, kind: input, shape index: {}]
  %s1 = inlined_call_operand.hbm [shape: f32[2,8,32], index: 1, kind: input, shape index: {}]
  %s2 = inlined_call_operand.hbm [shape: f32[2,1,8], index: 2, kind: input, shape index: {}]
  %s3 = inlined_call_operand.hbm [shape: f32[2,1,8], index: 3, kind: input, shape index: {}]
  %s4 = inlined_call_operand.vmem [shape: f32[32,96], index: 4, kind: input, shape index: {}]
  %s5 = inlined_call_operand.vmem [shape: f32[1,96], index: 5, kind: input, shape index: {}]
  %s6 = inlined_call_operand.vmem [shape: f32[32,32], index: 6, kind: input, shape index: {}]
  %s7 = inlined_call_operand.vmem [shape: f32[1,32], index: 7, kind: input, shape index: {}]
  %s8 = inlined_call_operand.vmem [shape: f32[32,32], index: 8, kind: input, shape index: {}]
  %s9 = inlined_call_operand.vmem [shape: f32[1,32], index: 9, kind: input, shape index: {}]
  %s10 = inlined_call_operand.hbm [shape: f32[32,64], index: 10, kind: input, shape index: {}]
  %s11 = inlined_call_operand.vmem [shape: f32[1,64], index: 11, kind: input, shape index: {}]
  %s12 = inlined_call_operand.hbm [shape: f32[32,32], index: 12, kind: input, shape index: {}]
  %s13 = inlined_call_operand.vmem [shape: f32[1,32], index: 13, kind: input, shape index: {}]
  %s14 = inlined_call_operand.hbm [shape: f32[32,64], index: 14, kind: input, shape index: {}]
  %s15 = inlined_call_operand.vmem [shape: f32[1,64], index: 15, kind: input, shape index: {}]
  %s16 = inlined_call_operand.vmem [shape: f32[64,32], index: 16, kind: input, shape index: {}]
  %s17 = inlined_call_operand.vmem [shape: f32[1,32], index: 17, kind: input, shape index: {}]
  %s18 = inlined_call_operand.vmem [shape: f32[1,32], index: 18, kind: input, shape index: {}]
  %s19 = inlined_call_operand.vmem [shape: f32[1,32], index: 19, kind: input, shape index: {}]
  %s20 = inlined_call_operand.vmem [shape: f32[1,32], index: 20, kind: input, shape index: {}]
  %s21 = inlined_call_operand.vmem [shape: f32[1,32], index: 21, kind: input, shape index: {}]
  %s22 = inlined_call_operand.vmem [shape: f32[1,32], index: 22, kind: input, shape index: {}]
  %s23 = inlined_call_operand.vmem [shape: f32[1,32], index: 23, kind: input, shape index: {}]
  %s24 = inlined_call_operand.hbm [shape: f32[2,8,32], index: 24, kind: output, shape index: {0}]
  %s25 = inlined_call_operand.hbm [shape: f32[2,8,32], index: 25, kind: output, shape index: {1}]
  %26 = xla_tuple %s24, %s25
  %s27 = sld [smem:[#allocation0]]
  $region165: #{tpu_custom_call.1} parent=0
    _
  %s29 = ssub.s32 1, %s27
  %s30 = scalar_select 0, %s29, %s27
  $region1: #{tpu_custom_call.1} parent=0
    #allocation2 [shape = 'u8[8192]{0}', space=vmem, size = 0x2000, scoped, tag = 'input window, operand 0']
    #allocation3 [shape = 's32[2]{0}', space=sflag, size = 0x8, scoped, tag = 'scoped memory for tpu_custom_call.1']
    #allocation4 [shape = 's32[2]{0}', space=sflag, size = 0x8, scoped, tag = 'scoped memory for tpu_custom_call.1']
    #allocation5 [shape = 'u8[8192]{0}', space=vmem, size = 0x2000, scoped, tag = 'input window, operand 1']
    #allocation6 [shape = 's32[2]{0}', space=sflag, size = 0x8, scoped, tag = 'scoped memory for tpu_custom_call.1']
    #allocation7 [shape = 'u8[1024]{0}', space=vmem, size = 0x400, scoped, tag = 'input window, operand 2']
    #allocation8 [shape = 'u8[1024]{0}', space=vmem, size = 0x400, scoped, tag = 'input window, operand 3']
    #allocation9 [shape = 's32[2]{0}', space=sflag, size = 0x8, scoped, tag = 'scoped memory for tpu_custom_call.1']
    #allocation10 [shape = 'u8[16384]{0}', space=vmem, size = 0x4000, scoped, tag = 'input window, operand 10, single buffered']
    #allocation11 [shape = 'u8[16384]{0}', space=vmem, size = 0x4000, scoped, tag = 'input window, operand 12, single buffered']
    #allocation12 [shape = 's32[1]{0}', space=sflag, size = 0x4, scoped, tag = 'scoped memory for tpu_custom_call.1']
    #allocation13 [shape = 'u8[16384]{0}', space=vmem, size = 0x4000, scoped, tag = 'input window, operand 14, single buffered']
    #allocation14 [shape = 'u8[8192]{0}', space=vmem, size = 0x2000, scoped, tag = 'output window, operand 0']
    #allocation15 [shape = 'u8[8192]{0}', space=vmem, size = 0x2000, scoped, tag = 'output window, operand 1']
    #allocation16 [shape = 's32[2]{0}', space=sflag, size = 0x8, scoped, tag = 'scoped memory for tpu_custom_call.1']
    %31 = vsyncpa [#allocation3], 0
    %s32 = scalar_lea.sflag [#allocation3], 1
    %33 = vsyncpa %s32, 0
    %34 = vsyncpa [#allocation6], 0
    %s35 = scalar_lea.sflag [#allocation6], 1
    %36 = vsyncpa %s35, 0
    %37 = vsyncpa [#allocation9], 0
    %s38 = scalar_lea.sflag [#allocation9], 1
    %39 = vsyncpa %s38, 0
    %40 = vsyncpa [#allocation12], 0
    %41 = vsyncpa [#allocation4], 0
    %s42 = scalar_lea.sflag [#allocation4], 1
    %43 = vsyncpa %s42, 0
    %44 = vsyncpa [#allocation16], 0
    %s45 = scalar_lea.sflag [#allocation16], 1
    %46 = vsyncpa %s45, 0
    loop: start=0, step=1, limit=4
    $region2: #{tpu_custom_call.1} parent=1 // loop_pre_header
      _
    $region3: #{tpu_custom_call.1} parent=1 // loop_header
      %s48 = sphi 0, %s52
      %p49 = scmp.ge.s32.totalorder %s48, 4
      %s58 = sphi 0, %s60
      %s61 = sphi 0, %s58
      %s62 = sphi 0, %s61
      %s78 = sphi 0, %s62
      %s84 = sphi 0, %s86
      %s87 = sphi 0, %s84
      %s88 = sphi 0, %s87
      %s104 = sphi 0, %s88
      %s110 = sphi 0, %s112
      %s113 = sphi 0, %s110
      %s114 = sphi 0, %s113
      %s130 = sphi 0, %s114
      %s136 = sphi 0, %s138
      %s139 = sphi 0, %s136
      %s140 = sphi 0, %s139
      %s156 = sphi 0, %s140
      %s160 = sphi 0, %s160
      %s162 = sphi 0, %s160
      %s163 = sphi 0, %s162
      %s177 = sphi 0, %s163
      %s181 = sphi 0, %s181
      %s183 = sphi 0, %s181
      %s184 = sphi 0, %s183
      %s198 = sphi 0, %s184
      %s202 = sphi 0, %s202
      %s204 = sphi 0, %s202
      %s205 = sphi 0, %s204
      %s219 = sphi 0, %s205
      %s223 = sphi 0, %s223
      %s225 = sphi 0, %s223
      %s226 = sphi 0, %s225
      %s240 = sphi 0, %s226
      %s244 = sphi 0, %s244
      %s246 = sphi 0, %s244
      %s247 = sphi 0, %s246
      %s261 = sphi 0, %s247
      %s265 = sphi 0, %s265
      %s267 = sphi 0, %s265
      %s268 = sphi 0, %s267
      %s282 = sphi 0, %s268
      %s286 = sphi 0, %s286
      %s288 = sphi 0, %s286
      %s289 = sphi 0, %s288
      %s303 = sphi 0, %s289
      %s307 = sphi 0, %s307
      %s309 = sphi 0, %s307
      %s310 = sphi 0, %s309
      %s324 = sphi 0, %s310
      %s328 = sphi 0, %s328
      %s330 = sphi 0, %s328
      %s331 = sphi 0, %s330
      %s345 = sphi 0, %s331
      %s349 = sphi 0, %s349
      %s351 = sphi 0, %s349
      %s352 = sphi 0, %s351
      %s366 = sphi 0, %s352
      %s370 = sphi 0, %s370
      %s372 = sphi 0, %s370
      %s373 = sphi 0, %s372
      %s387 = sphi 0, %s373
      %s391 = sphi 0, %s391
      %s393 = sphi 0, %s391
      %s394 = sphi 0, %s393
      %s408 = sphi 0, %s394
      %s412 = sphi 0, %s412
      %s414 = sphi 0, %s412
      %s415 = sphi 0, %s414
      %s429 = sphi 0, %s415
      %s433 = sphi 0, %s433
      %s435 = sphi 0, %s433
      %s436 = sphi 0, %s435
      %s450 = sphi 0, %s436
      %s454 = sphi 0, %s454
      %s456 = sphi 0, %s454
      %s457 = sphi 0, %s456
      %s471 = sphi 0, %s457
      %s475 = sphi 0, %s475
      %s477 = sphi 0, %s475
      %s478 = sphi 0, %s477
      %s492 = sphi 0, %s478
      %s496 = sphi 0, %s496
      %s498 = sphi 0, %s496
      %s499 = sphi 0, %s498
      %s513 = sphi 0, %s499
      %s517 = sphi 0, %s517
      %s519 = sphi 0, %s517
      %s520 = sphi 0, %s519
      %s534 = sphi 0, %s520
      %s538 = sphi 0, %s538
      %s540 = sphi 0, %s538
      %s541 = sphi 0, %s540
      %s555 = sphi 0, %s541
      %s559 = sphi 0, %s559
      %s561 = sphi 0, %s559
      %s562 = sphi 0, %s561
      %s576 = sphi 0, %s562
      %s582 = sphi 0, %s584
      %s585 = sphi 0, %s582
      %s586 = sphi 0, %s585
      %s602 = sphi 0, %s586
      %s608 = sphi 0, %s610
      %s611 = sphi 0, %s608
      %s612 = sphi 0, %s611
      %s628 = sphi 0, %s612
    $region4: #{tpu_custom_call.1} parent=1 // loop_header_branch
      %51 = sbr.rel (%p49) target = $region8
    $region5: #{tpu_custom_call.1} parent=1 // loop_body
      %s53 = ssub.s32 %s48, 1
      %s54 = ssub.s32 %s48, 2
      %s55 = sadd.s32 %s48, 1
      %s56 = ssub.s32 %s48, %s55
      %p57 = scmp.eq.s32.totalorder %s56, 0
      %s59 = sadd.s32 %s58, 1
      %s60 = scalar_select %p57, %s58, %s59
      %p63 = pneg %p57
      %p64 = scmp.eq.s32.totalorder %s48, 1
      %p65 = por %p63, %p64
      %p66 = scmp.ne.s32.totalorder %s58, %s61
      %p67 = scmp.eq.s32.totalorder %s48, 0
      %p68 = por %p66, %p67
      %p69 = scmp.ne.s32.totalorder %s58, %s61
      %p70 = scmp.eq.s32.totalorder %s53, 1
      %p71 = por %p69, %p70
      %p72 = scmp.ne.s32.totalorder %s61, %s62
      %p73 = scmp.eq.s32.totalorder %s53, 0
      %p74 = por %p72, %p73
      %p75 = scmp.ne.s32.totalorder %s61, %s62
      %p76 = scmp.eq.s32.totalorder %s54, 1
      %p77 = por %p75, %p76
      %p79 = scmp.ne.s32.totalorder %s62, %s78
      %p80 = scmp.eq.s32.totalorder %s54, 0
      %p81 = por %p79, %p80
      %s82 = ssub.s32 %s48, %s55
      %p83 = scmp.eq.s32.totalorder %s82, 0
      %s85 = sadd.s32 %s84, 1
      %s86 = scalar_select %p83, %s84, %s85
      %p89 = pneg %p83
      %p90 = scmp.eq.s32.totalorder %s48, 1
      %p91 = por %p89, %p90
      %p92 = scmp.ne.s32.totalorder %s84, %s87
      %p93 = scmp.eq.s32.totalorder %s48, 0
      %p94 = por %p92, %p93
      %p95 = scmp.ne.s32.totalorder %s84, %s87
      %p96 = scmp.eq.s32.totalorder %s53, 1
      %p97 = por %p95, %p96
      %p98 = scmp.ne.s32.totalorder %s87, %s88
      %p99 = scmp.eq.s32.totalorder %s53, 0
      %p100 = por %p98, %p99
      %p101 = scmp.ne.s32.totalorder %s87, %s88
      %p102 = scmp.eq.s32.totalorder %s54, 1
      %p103 = por %p101, %p102
      %p105 = scmp.ne.s32.totalorder %s88, %s104
      %p106 = scmp.eq.s32.totalorder %s54, 0
      %p107 = por %p105, %p106
      %s108 = ssub.s32 %s48, %s55
      %p109 = scmp.eq.s32.totalorder %s108, 0
      %s111 = sadd.s32 %s110, 1
      %s112 = scalar_select %p109, %s110, %s111
      %p115 = pneg %p109
      %p116 = scmp.eq.s32.totalorder %s48, 1
      %p117 = por %p115, %p116
      %p118 = scmp.ne.s32.totalorder %s110, %s113
      %p119 = scmp.eq.s32.totalorder %s48, 0
      %p120 = por %p118, %p119
      %p121 = scmp.ne.s32.totalorder %s110, %s113
      %p122 = scmp.eq.s32.totalorder %s53, 1
      %p123 = por %p121, %p122
      %p124 = scmp.ne.s32.totalorder %s113, %s114
      %p125 = scmp.eq.s32.totalorder %s53, 0
      %p126 = por %p124, %p125
      %p127 = scmp.ne.s32.totalorder %s113, %s114
      %p128 = scmp.eq.s32.totalorder %s54, 1
      %p129 = por %p127, %p128
      %p131 = scmp.ne.s32.totalorder %s114, %s130
      %p132 = scmp.eq.s32.totalorder %s54, 0
      %p133 = por %p131, %p132
      %s134 = ssub.s32 %s48, %s55
      %p135 = scmp.eq.s32.totalorder %s134, 0
      %s137 = sadd.s32 %s136, 1
      %s138 = scalar_select %p135, %s136, %s137
      %p141 = pneg %p135
      %p142 = scmp.eq.s32.totalorder %s48, 1
      %p143 = por %p141, %p142
      %p144 = scmp.ne.s32.totalorder %s136, %s139
      %p145 = scmp.eq.s32.totalorder %s48, 0
      %p146 = por %p144, %p145
      %p147 = scmp.ne.s32.totalorder %s136, %s139
      %p148 = scmp.eq.s32.totalorder %s53, 1
      %p149 = por %p147, %p148
      %p150 = scmp.ne.s32.totalorder %s139, %s140
      %p151 = scmp.eq.s32.totalorder %s53, 0
      %p152 = por %p150, %p151
      %p153 = scmp.ne.s32.totalorder %s139, %s140
      %p154 = scmp.eq.s32.totalorder %s54, 1
      %p155 = por %p153, %p154
      %p157 = scmp.ne.s32.totalorder %s140, %s156
      %p158 = scmp.eq.s32.totalorder %s54, 0
      %p159 = por %p157, %p158
      %s161 = sadd.s32 %s160, 1
      %p164 = scmp.eq.s32.totalorder %s48, 1
      %p165 = scmp.ne.s32.totalorder %s160, %s162
      %p166 = scmp.eq.s32.totalorder %s48, 0
      %p167 = por %p165, %p166
      %p168 = scmp.ne.s32.totalorder %s160, %s162
      %p169 = scmp.eq.s32.totalorder %s53, 1
      %p170 = por %p168, %p169
      %p171 = scmp.ne.s32.totalorder %s162, %s163
      %p172 = scmp.eq.s32.totalorder %s53, 0
      %p173 = por %p171, %p172
      %p174 = scmp.ne.s32.totalorder %s162, %s163
      %p175 = scmp.eq.s32.totalorder %s54, 1
      %p176 = por %p174, %p175
      %p178 = scmp.ne.s32.totalorder %s163, %s177
      %p179 = scmp.eq.s32.totalorder %s54, 0
      %p180 = por %p178, %p179
      %s182 = sadd.s32 %s181, 1
      %p185 = scmp.eq.s32.totalorder %s48, 1
      %p186 = scmp.ne.s32.totalorder %s181, %s183
      %p187 = scmp.eq.s32.totalorder %s48, 0
      %p188 = por %p186, %p187
      %p189 = scmp.ne.s32.totalorder %s181, %s183
      %p190 = scmp.eq.s32.totalorder %s53, 1
      %p191 = por %p189, %p190
      %p192 = scmp.ne.s32.totalorder %s183, %s184
      %p193 = scmp.eq.s32.totalorder %s53, 0
      %p194 = por %p192, %p193
      %p195 = scmp.ne.s32.totalorder %s183, %s184
      %p196 = scmp.eq.s32.totalorder %s54, 1
      %p197 = por %p195, %p196
      %p199 = scmp.ne.s32.totalorder %s184, %s198
      %p200 = scmp.eq.s32.totalorder %s54, 0
      %p201 = por %p199, %p200
      %s203 = sadd.s32 %s202, 1
      %p206 = scmp.eq.s32.totalorder %s48, 1
      %p207 = scmp.ne.s32.totalorder %s202, %s204
      %p208 = scmp.eq.s32.totalorder %s48, 0
      %p209 = por %p207, %p208
      %p210 = scmp.ne.s32.totalorder %s202, %s204
      %p211 = scmp.eq.s32.totalorder %s53, 1
      %p212 = por %p210, %p211
      %p213 = scmp.ne.s32.totalorder %s204, %s205
      %p214 = scmp.eq.s32.totalorder %s53, 0
      %p215 = por %p213, %p214
      %p216 = scmp.ne.s32.totalorder %s204, %s205
      %p217 = scmp.eq.s32.totalorder %s54, 1
      %p218 = por %p216, %p217
      %p220 = scmp.ne.s32.totalorder %s205, %s219
      %p221 = scmp.eq.s32.totalorder %s54, 0
      %p222 = por %p220, %p221
      %s224 = sadd.s32 %s223, 1
      %p227 = scmp.eq.s32.totalorder %s48, 1
      %p228 = scmp.ne.s32.totalorder %s223, %s225
      %p229 = scmp.eq.s32.totalorder %s48, 0
      %p230 = por %p228, %p229
      %p231 = scmp.ne.s32.totalorder %s223, %s225
      %p232 = scmp.eq.s32.totalorder %s53, 1
      %p233 = por %p231, %p232
      %p234 = scmp.ne.s32.totalorder %s225, %s226
      %p235 = scmp.eq.s32.totalorder %s53, 0
      %p236 = por %p234, %p235
      %p237 = scmp.ne.s32.totalorder %s225, %s226
      %p238 = scmp.eq.s32.totalorder %s54, 1
      %p239 = por %p237, %p238
      %p241 = scmp.ne.s32.totalorder %s226, %s240
      %p242 = scmp.eq.s32.totalorder %s54, 0
      %p243 = por %p241, %p242
      %s245 = sadd.s32 %s244, 1
      %p248 = scmp.eq.s32.totalorder %s48, 1
      %p249 = scmp.ne.s32.totalorder %s244, %s246
      %p250 = scmp.eq.s32.totalorder %s48, 0
      %p251 = por %p249, %p250
      %p252 = scmp.ne.s32.totalorder %s244, %s246
      %p253 = scmp.eq.s32.totalorder %s53, 1
      %p254 = por %p252, %p253
      %p255 = scmp.ne.s32.totalorder %s246, %s247
      %p256 = scmp.eq.s32.totalorder %s53, 0
      %p257 = por %p255, %p256
      %p258 = scmp.ne.s32.totalorder %s246, %s247
      %p259 = scmp.eq.s32.totalorder %s54, 1
      %p260 = por %p258, %p259
      %p262 = scmp.ne.s32.totalorder %s247, %s261
      %p263 = scmp.eq.s32.totalorder %s54, 0
      %p264 = por %p262, %p263
      %s266 = sadd.s32 %s265, 1
      %p269 = scmp.eq.s32.totalorder %s48, 1
      %p270 = scmp.ne.s32.totalorder %s265, %s267
      %p271 = scmp.eq.s32.totalorder %s48, 0
      %p272 = por %p270, %p271
      %p273 = scmp.ne.s32.totalorder %s265, %s267
      %p274 = scmp.eq.s32.totalorder %s53, 1
      %p275 = por %p273, %p274
      %p276 = scmp.ne.s32.totalorder %s267, %s268
      %p277 = scmp.eq.s32.totalorder %s53, 0
      %p278 = por %p276, %p277
      %p279 = scmp.ne.s32.totalorder %s267, %s268
      %p280 = scmp.eq.s32.totalorder %s54, 1
      %p281 = por %p279, %p280
      %p283 = scmp.ne.s32.totalorder %s268, %s282
      %p284 = scmp.eq.s32.totalorder %s54, 0
      %p285 = por %p283, %p284
      %s287 = sadd.s32 %s286, 1
      %p290 = scmp.eq.s32.totalorder %s48, 1
      %p291 = scmp.ne.s32.totalorder %s286, %s288
      %p292 = scmp.eq.s32.totalorder %s48, 0
      %p293 = por %p291, %p292
      %p294 = scmp.ne.s32.totalorder %s286, %s288
      %p295 = scmp.eq.s32.totalorder %s53, 1
      %p296 = por %p294, %p295
      %p297 = scmp.ne.s32.totalorder %s288, %s289
      %p298 = scmp.eq.s32.totalorder %s53, 0
      %p299 = por %p297, %p298
      %p300 = scmp.ne.s32.totalorder %s288, %s289
      %p301 = scmp.eq.s32.totalorder %s54, 1
      %p302 = por %p300, %p301
      %p304 = scmp.ne.s32.totalorder %s289, %s303
      %p305 = scmp.eq.s32.totalorder %s54, 0
      %p306 = por %p304, %p305
      %s308 = sadd.s32 %s307, 1
      %p311 = scmp.eq.s32.totalorder %s48, 1
      %p312 = scmp.ne.s32.totalorder %s307, %s309
      %p313 = scmp.eq.s32.totalorder %s48, 0
      %p314 = por %p312, %p313
      %p315 = scmp.ne.s32.totalorder %s307, %s309
      %p316 = scmp.eq.s32.totalorder %s53, 1
      %p317 = por %p315, %p316
      %p318 = scmp.ne.s32.totalorder %s309, %s310
      %p319 = scmp.eq.s32.totalorder %s53, 0
      %p320 = por %p318, %p319
      %p321 = scmp.ne.s32.totalorder %s309, %s310
      %p322 = scmp.eq.s32.totalorder %s54, 1
      %p323 = por %p321, %p322
      %p325 = scmp.ne.s32.totalorder %s310, %s324
      %p326 = scmp.eq.s32.totalorder %s54, 0
      %p327 = por %p325, %p326
      %s329 = sadd.s32 %s328, 1
      %p332 = scmp.eq.s32.totalorder %s48, 1
      %p333 = scmp.ne.s32.totalorder %s328, %s330
      %p334 = scmp.eq.s32.totalorder %s48, 0
      %p335 = por %p333, %p334
      %p336 = scmp.ne.s32.totalorder %s328, %s330
      %p337 = scmp.eq.s32.totalorder %s53, 1
      %p338 = por %p336, %p337
      %p339 = scmp.ne.s32.totalorder %s330, %s331
      %p340 = scmp.eq.s32.totalorder %s53, 0
      %p341 = por %p339, %p340
      %p342 = scmp.ne.s32.totalorder %s330, %s331
      %p343 = scmp.eq.s32.totalorder %s54, 1
      %p344 = por %p342, %p343
      %p346 = scmp.ne.s32.totalorder %s331, %s345
      %p347 = scmp.eq.s32.totalorder %s54, 0
      %p348 = por %p346, %p347
      %s350 = sadd.s32 %s349, 1
      %p353 = scmp.eq.s32.totalorder %s48, 1
      %p354 = scmp.ne.s32.totalorder %s349, %s351
      %p355 = scmp.eq.s32.totalorder %s48, 0
      %p356 = por %p354, %p355
      %p357 = scmp.ne.s32.totalorder %s349, %s351
      %p358 = scmp.eq.s32.totalorder %s53, 1
      %p359 = por %p357, %p358
      %p360 = scmp.ne.s32.totalorder %s351, %s352
      %p361 = scmp.eq.s32.totalorder %s53, 0
      %p362 = por %p360, %p361
      %p363 = scmp.ne.s32.totalorder %s351, %s352
      %p364 = scmp.eq.s32.totalorder %s54, 1
      %p365 = por %p363, %p364
      %p367 = scmp.ne.s32.totalorder %s352, %s366
      %p368 = scmp.eq.s32.totalorder %s54, 0
      %p369 = por %p367, %p368
      %s371 = sadd.s32 %s370, 1
      %p374 = scmp.eq.s32.totalorder %s48, 1
      %p375 = scmp.ne.s32.totalorder %s370, %s372
      %p376 = scmp.eq.s32.totalorder %s48, 0
      %p377 = por %p375, %p376
      %p378 = scmp.ne.s32.totalorder %s370, %s372
      %p379 = scmp.eq.s32.totalorder %s53, 1
      %p380 = por %p378, %p379
      %p381 = scmp.ne.s32.totalorder %s372, %s373
      %p382 = scmp.eq.s32.totalorder %s53, 0
      %p383 = por %p381, %p382
      %p384 = scmp.ne.s32.totalorder %s372, %s373
      %p385 = scmp.eq.s32.totalorder %s54, 1
      %p386 = por %p384, %p385
      %p388 = scmp.ne.s32.totalorder %s373, %s387
      %p389 = scmp.eq.s32.totalorder %s54, 0
      %p390 = por %p388, %p389
      %s392 = sadd.s32 %s391, 1
      %p395 = scmp.eq.s32.totalorder %s48, 1
      %p396 = scmp.ne.s32.totalorder %s391, %s393
      %p397 = scmp.eq.s32.totalorder %s48, 0
      %p398 = por %p396, %p397
      %p399 = scmp.ne.s32.totalorder %s391, %s393
      %p400 = scmp.eq.s32.totalorder %s53, 1
      %p401 = por %p399, %p400
      %p402 = scmp.ne.s32.totalorder %s393, %s394
      %p403 = scmp.eq.s32.totalorder %s53, 0
      %p404 = por %p402, %p403
      %p405 = scmp.ne.s32.totalorder %s393, %s394
      %p406 = scmp.eq.s32.totalorder %s54, 1
      %p407 = por %p405, %p406
      %p409 = scmp.ne.s32.totalorder %s394, %s408
      %p410 = scmp.eq.s32.totalorder %s54, 0
      %p411 = por %p409, %p410
      %s413 = sadd.s32 %s412, 1
      %p416 = scmp.eq.s32.totalorder %s48, 1
      %p417 = scmp.ne.s32.totalorder %s412, %s414
      %p418 = scmp.eq.s32.totalorder %s48, 0
      %p419 = por %p417, %p418
      %p420 = scmp.ne.s32.totalorder %s412, %s414
      %p421 = scmp.eq.s32.totalorder %s53, 1
      %p422 = por %p420, %p421
      %p423 = scmp.ne.s32.totalorder %s414, %s415
      %p424 = scmp.eq.s32.totalorder %s53, 0
      %p425 = por %p423, %p424
      %p426 = scmp.ne.s32.totalorder %s414, %s415
      %p427 = scmp.eq.s32.totalorder %s54, 1
      %p428 = por %p426, %p427
      %p430 = scmp.ne.s32.totalorder %s415, %s429
      %p431 = scmp.eq.s32.totalorder %s54, 0
      %p432 = por %p430, %p431
      %s434 = sadd.s32 %s433, 1
      %p437 = scmp.eq.s32.totalorder %s48, 1
      %p438 = scmp.ne.s32.totalorder %s433, %s435
      %p439 = scmp.eq.s32.totalorder %s48, 0
      %p440 = por %p438, %p439
      %p441 = scmp.ne.s32.totalorder %s433, %s435
      %p442 = scmp.eq.s32.totalorder %s53, 1
      %p443 = por %p441, %p442
      %p444 = scmp.ne.s32.totalorder %s435, %s436
      %p445 = scmp.eq.s32.totalorder %s53, 0
      %p446 = por %p444, %p445
      %p447 = scmp.ne.s32.totalorder %s435, %s436
      %p448 = scmp.eq.s32.totalorder %s54, 1
      %p449 = por %p447, %p448
      %p451 = scmp.ne.s32.totalorder %s436, %s450
      %p452 = scmp.eq.s32.totalorder %s54, 0
      %p453 = por %p451, %p452
      %s455 = sadd.s32 %s454, 1
      %p458 = scmp.eq.s32.totalorder %s48, 1
      %p459 = scmp.ne.s32.totalorder %s454, %s456
      %p460 = scmp.eq.s32.totalorder %s48, 0
      %p461 = por %p459, %p460
      %p462 = scmp.ne.s32.totalorder %s454, %s456
      %p463 = scmp.eq.s32.totalorder %s53, 1
      %p464 = por %p462, %p463
      %p465 = scmp.ne.s32.totalorder %s456, %s457
      %p466 = scmp.eq.s32.totalorder %s53, 0
      %p467 = por %p465, %p466
      %p468 = scmp.ne.s32.totalorder %s456, %s457
      %p469 = scmp.eq.s32.totalorder %s54, 1
      %p470 = por %p468, %p469
      %p472 = scmp.ne.s32.totalorder %s457, %s471
      %p473 = scmp.eq.s32.totalorder %s54, 0
      %p474 = por %p472, %p473
      %s476 = sadd.s32 %s475, 1
      %p479 = scmp.eq.s32.totalorder %s48, 1
      %p480 = scmp.ne.s32.totalorder %s475, %s477
      %p481 = scmp.eq.s32.totalorder %s48, 0
      %p482 = por %p480, %p481
      %p483 = scmp.ne.s32.totalorder %s475, %s477
      %p484 = scmp.eq.s32.totalorder %s53, 1
      %p485 = por %p483, %p484
      %p486 = scmp.ne.s32.totalorder %s477, %s478
      %p487 = scmp.eq.s32.totalorder %s53, 0
      %p488 = por %p486, %p487
      %p489 = scmp.ne.s32.totalorder %s477, %s478
      %p490 = scmp.eq.s32.totalorder %s54, 1
      %p491 = por %p489, %p490
      %p493 = scmp.ne.s32.totalorder %s478, %s492
      %p494 = scmp.eq.s32.totalorder %s54, 0
      %p495 = por %p493, %p494
      %s497 = sadd.s32 %s496, 1
      %p500 = scmp.eq.s32.totalorder %s48, 1
      %p501 = scmp.ne.s32.totalorder %s496, %s498
      %p502 = scmp.eq.s32.totalorder %s48, 0
      %p503 = por %p501, %p502
      %p504 = scmp.ne.s32.totalorder %s496, %s498
      %p505 = scmp.eq.s32.totalorder %s53, 1
      %p506 = por %p504, %p505
      %p507 = scmp.ne.s32.totalorder %s498, %s499
      %p508 = scmp.eq.s32.totalorder %s53, 0
      %p509 = por %p507, %p508
      %p510 = scmp.ne.s32.totalorder %s498, %s499
      %p511 = scmp.eq.s32.totalorder %s54, 1
      %p512 = por %p510, %p511
      %p514 = scmp.ne.s32.totalorder %s499, %s513
      %p515 = scmp.eq.s32.totalorder %s54, 0
      %p516 = por %p514, %p515
      %s518 = sadd.s32 %s517, 1
      %p521 = scmp.eq.s32.totalorder %s48, 1
      %p522 = scmp.ne.s32.totalorder %s517, %s519
      %p523 = scmp.eq.s32.totalorder %s48, 0
      %p524 = por %p522, %p523
      %p525 = scmp.ne.s32.totalorder %s517, %s519
      %p526 = scmp.eq.s32.totalorder %s53, 1
      %p527 = por %p525, %p526
      %p528 = scmp.ne.s32.totalorder %s519, %s520
      %p529 = scmp.eq.s32.totalorder %s53, 0
      %p530 = por %p528, %p529
      %p531 = scmp.ne.s32.totalorder %s519, %s520
      %p532 = scmp.eq.s32.totalorder %s54, 1
      %p533 = por %p531, %p532
      %p535 = scmp.ne.s32.totalorder %s520, %s534
      %p536 = scmp.eq.s32.totalorder %s54, 0
      %p537 = por %p535, %p536
      %s539 = sadd.s32 %s538, 1
      %p542 = scmp.eq.s32.totalorder %s48, 1
      %p543 = scmp.ne.s32.totalorder %s538, %s540
      %p544 = scmp.eq.s32.totalorder %s48, 0
      %p545 = por %p543, %p544
      %p546 = scmp.ne.s32.totalorder %s538, %s540
      %p547 = scmp.eq.s32.totalorder %s53, 1
      %p548 = por %p546, %p547
      %p549 = scmp.ne.s32.totalorder %s540, %s541
      %p550 = scmp.eq.s32.totalorder %s53, 0
      %p551 = por %p549, %p550
      %p552 = scmp.ne.s32.totalorder %s540, %s541
      %p553 = scmp.eq.s32.totalorder %s54, 1
      %p554 = por %p552, %p553
      %p556 = scmp.ne.s32.totalorder %s541, %s555
      %p557 = scmp.eq.s32.totalorder %s54, 0
      %p558 = por %p556, %p557
      %s560 = sadd.s32 %s559, 1
      %p563 = scmp.eq.s32.totalorder %s48, 1
      %p564 = scmp.ne.s32.totalorder %s559, %s561
      %p565 = scmp.eq.s32.totalorder %s48, 0
      %p566 = por %p564, %p565
      %p567 = scmp.ne.s32.totalorder %s559, %s561
      %p568 = scmp.eq.s32.totalorder %s53, 1
      %p569 = por %p567, %p568
      %p570 = scmp.ne.s32.totalorder %s561, %s562
      %p571 = scmp.eq.s32.totalorder %s53, 0
      %p572 = por %p570, %p571
      %p573 = scmp.ne.s32.totalorder %s561, %s562
      %p574 = scmp.eq.s32.totalorder %s54, 1
      %p575 = por %p573, %p574
      %p577 = scmp.ne.s32.totalorder %s562, %s576
      %p578 = scmp.eq.s32.totalorder %s54, 0
      %p579 = por %p577, %p578
      %s580 = ssub.s32 %s48, %s55
      %p581 = scmp.eq.s32.totalorder %s580, 0
      %s583 = sadd.s32 %s582, 1
      %s584 = scalar_select %p581, %s582, %s583
      %p587 = pneg %p581
      %p588 = scmp.eq.s32.totalorder %s48, 1
      %p589 = por %p587, %p588
      %p590 = scmp.ne.s32.totalorder %s582, %s585
      %p591 = scmp.eq.s32.totalorder %s48, 0
      %p592 = por %p590, %p591
      %p593 = scmp.ne.s32.totalorder %s582, %s585
      %p594 = scmp.eq.s32.totalorder %s53, 1
      %p595 = por %p593, %p594
      %p596 = scmp.ne.s32.totalorder %s585, %s586
      %p597 = scmp.eq.s32.totalorder %s53, 0
      %p598 = por %p596, %p597
      %p599 = scmp.ne.s32.totalorder %s585, %s586
      %p600 = scmp.eq.s32.totalorder %s54, 1
      %p601 = por %p599, %p600
      %p603 = scmp.ne.s32.totalorder %s586, %s602
      %p604 = scmp.eq.s32.totalorder %s54, 0
      %p605 = por %p603, %p604
      %s606 = ssub.s32 %s48, %s55
      %p607 = scmp.eq.s32.totalorder %s606, 0
      %s609 = sadd.s32 %s608, 1
      %s610 = scalar_select %p607, %s608, %s609
      %p613 = pneg %p607
      %p614 = scmp.eq.s32.totalorder %s48, 1
      %p615 = por %p613, %p614
      %p616 = scmp.ne.s32.totalorder %s608, %s611
      %p617 = scmp.eq.s32.totalorder %s48, 0
      %p618 = por %p616, %p617
      %p619 = scmp.ne.s32.totalorder %s608, %s611
      %p620 = scmp.eq.s32.totalorder %s53, 1
      %p621 = por %p619, %p620
      %p622 = scmp.ne.s32.totalorder %s611, %s612
      %p623 = scmp.eq.s32.totalorder %s53, 0
      %p624 = por %p622, %p623
      %p625 = scmp.ne.s32.totalorder %s611, %s612
      %p626 = scmp.eq.s32.totalorder %s54, 1
      %p627 = por %p625, %p626
      %p629 = scmp.ne.s32.totalorder %s612, %s628
      %p630 = scmp.eq.s32.totalorder %s54, 0
      %p631 = por %p629, %p630
      %p632 = scmp.le.s32.totalorder 1, %s48
      %p633 = scmp.lt.s32.totalorder %s48, 3
      %p634 = pnand %p632, %p633
      %p635 = pneg %p634
      // Predicated region
      $region9: #{tpu_custom_call.1} parent=5 // pred_check
        _
      $region10: #{tpu_custom_call.1} parent=5 // pred_check_branch
        %637 = sbr.rel (%p634) target = $region12
      $region11: #{tpu_custom_call.1} parent=5 // pred_region
        %s638 = ssub.s32 %s48, 1
        // Predicated region
        $region13: #{tpu_custom_call.1} parent=11 // pred_check
          %p639 = pneg %p173
        $region14: #{tpu_custom_call.1} parent=11 // pred_check_branch
          %641 = sbr.rel (%p639) target = $region16
        $region15: #{tpu_custom_call.1} parent=11 // pred_region
          _
        $region16: #{tpu_custom_call.1} parent=11 // pred_fallthru
          _
        // Predicated region
        $region17: #{tpu_custom_call.1} parent=11 // pred_check
          %p642 = pneg %p194
        $region18: #{tpu_custom_call.1} parent=11 // pred_check_branch
          %644 = sbr.rel (%p642) target = $region20
        $region19: #{tpu_custom_call.1} parent=11 // pred_region
          _
        $region20: #{tpu_custom_call.1} parent=11 // pred_fallthru
          _
        // Predicated region
        $region21: #{tpu_custom_call.1} parent=11 // pred_check
          %p645 = pneg %p215
        $region22: #{tpu_custom_call.1} parent=11 // pred_check_branch
          %647 = sbr.rel (%p645) target = $region24
        $region23: #{tpu_custom_call.1} parent=11 // pred_region
          _
        $region24: #{tpu_custom_call.1} parent=11 // pred_fallthru
          _
        // Predicated region
        $region25: #{tpu_custom_call.1} parent=11 // pred_check
          %p648 = pneg %p236
        $region26: #{tpu_custom_call.1} parent=11 // pred_check_branch
          %650 = sbr.rel (%p648) target = $region28
        $region27: #{tpu_custom_call.1} parent=11 // pred_region
          _
        $region28: #{tpu_custom_call.1} parent=11 // pred_fallthru
          _
        // Predicated region
        $region29: #{tpu_custom_call.1} parent=11 // pred_check
          %p651 = pneg %p257
        $region30: #{tpu_custom_call.1} parent=11 // pred_check_branch
          %653 = sbr.rel (%p651) target = $region32
        $region31: #{tpu_custom_call.1} parent=11 // pred_region
          _
        $region32: #{tpu_custom_call.1} parent=11 // pred_fallthru
          _
        // Predicated region
        $region33: #{tpu_custom_call.1} parent=11 // pred_check
          %p654 = pneg %p278
        $region34: #{tpu_custom_call.1} parent=11 // pred_check_branch
          %656 = sbr.rel (%p654) target = $region36
        $region35: #{tpu_custom_call.1} parent=11 // pred_region
          _
        $region36: #{tpu_custom_call.1} parent=11 // pred_fallthru
          _
        // Predicated region
        $region37: #{tpu_custom_call.1} parent=11 // pred_check
          %p657 = pneg %p299
        $region38: #{tpu_custom_call.1} parent=11 // pred_check_branch
          %659 = sbr.rel (%p657) target = $region40
        $region39: #{tpu_custom_call.1} parent=11 // pred_region
          %661 = vsyncadd [#allocation9], 0
          %s662 = sshll.u32 %s10, 4
          %s663 = int_to_ptr.hbm [resolvable:$true] %s662
          %s664 = sshll.u32 [#allocation10], 4
          %s665 = int_to_ptr.vmem [resolvable:$true] %s664
          %670 = dma.hbm_to_vmem [thread:$0]  %s663, 512, %s665, [#allocation9], 128, 128, 8
        $region40: #{tpu_custom_call.1} parent=11 // pred_fallthru
          _
        // Predicated region
        $region41: #{tpu_custom_call.1} parent=11 // pred_check
          %p671 = pneg %p320
        $region42: #{tpu_custom_call.1} parent=11 // pred_check_branch
          %673 = sbr.rel (%p671) target = $region44
        $region43: #{tpu_custom_call.1} parent=11 // pred_region
          _
        $region44: #{tpu_custom_call.1} parent=11 // pred_fallthru
          _
        // Predicated region
        $region45: #{tpu_custom_call.1} parent=11 // pred_check
          %p674 = pneg %p341
        $region46: #{tpu_custom_call.1} parent=11 // pred_check_branch
          %676 = sbr.rel (%p674) target = $region48
        $region47: #{tpu_custom_call.1} parent=11 // pred_region
          %678 = vsyncadd [#allocation12], 0
          %s679 = sshll.u32 %s12, 4
          %s680 = int_to_ptr.hbm [resolvable:$true] %s679
          %s681 = sshll.u32 [#allocation11], 4
          %s682 = int_to_ptr.vmem [resolvable:$true] %s681
          %687 = dma.hbm_to_vmem [thread:$0]  %s680, 512, %s682, [#allocation12], 128, 128, 8
        $region48: #{tpu_custom_call.1} parent=11 // pred_fallthru
          _
        // Predicated region
        $region49: #{tpu_custom_call.1} parent=11 // pred_check
          %p688 = pneg %p362
        $region50: #{tpu_custom_call.1} parent=11 // pred_check_branch
          %690 = sbr.rel (%p688) target = $region52
        $region51: #{tpu_custom_call.1} parent=11 // pred_region
          _
        $region52: #{tpu_custom_call.1} parent=11 // pred_fallthru
          _
        // Predicated region
        $region53: #{tpu_custom_call.1} parent=11 // pred_check
          %p691 = pneg %p383
        $region54: #{tpu_custom_call.1} parent=11 // pred_check_branch
          %693 = sbr.rel (%p691) target = $region56
        $region55: #{tpu_custom_call.1} parent=11 // pred_region
          %695 = vsyncadd [#allocation12], 0
          %s696 = sshll.u32 %s14, 4
          %s697 = int_to_ptr.hbm [resolvable:$true] %s696
          %s698 = sshll.u32 [#allocation13], 4
          %s699 = int_to_ptr.vmem [resolvable:$true] %s698
          %704 = dma.hbm_to_vmem [thread:$0]  %s697, 512, %s699, [#allocation12], 128, 128, 8
        $region56: #{tpu_custom_call.1} parent=11 // pred_fallthru
          _
        // Predicated region
        $region57: #{tpu_custom_call.1} parent=11 // pred_check
          %p705 = pneg %p404
        $region58: #{tpu_custom_call.1} parent=11 // pred_check_branch
          %707 = sbr.rel (%p705) target = $region60
        $region59: #{tpu_custom_call.1} parent=11 // pred_region
          _
        $region60: #{tpu_custom_call.1} parent=11 // pred_fallthru
          _
        // Predicated region
        $region61: #{tpu_custom_call.1} parent=11 // pred_check
          %p708 = pneg %p425
        $region62: #{tpu_custom_call.1} parent=11 // pred_check_branch
          %710 = sbr.rel (%p708) target = $region64
        $region63: #{tpu_custom_call.1} parent=11 // pred_region
          _
        $region64: #{tpu_custom_call.1} parent=11 // pred_fallthru
          _
        // Predicated region
        $region65: #{tpu_custom_call.1} parent=11 // pred_check
          %p711 = pneg %p446
        $region66: #{tpu_custom_call.1} parent=11 // pred_check_branch
          %713 = sbr.rel (%p711) target = $region68
        $region67: #{tpu_custom_call.1} parent=11 // pred_region
          _
        $region68: #{tpu_custom_call.1} parent=11 // pred_fallthru
          _
        // Predicated region
        $region69: #{tpu_custom_call.1} parent=11 // pred_check
          %p714 = pneg %p467
        $region70: #{tpu_custom_call.1} parent=11 // pred_check_branch
          %716 = sbr.rel (%p714) target = $region72
        $region71: #{tpu_custom_call.1} parent=11 // pred_region
          _
        $region72: #{tpu_custom_call.1} parent=11 // pred_fallthru
          _
        // Predicated region
        $region73: #{tpu_custom_call.1} parent=11 // pred_check
          %p717 = pneg %p488
        $region74: #{tpu_custom_call.1} parent=11 // pred_check_branch
          %719 = sbr.rel (%p717) target = $region76
        $region75: #{tpu_custom_call.1} parent=11 // pred_region
          _
        $region76: #{tpu_custom_call.1} parent=11 // pred_fallthru
          _
        // Predicated region
        $region77: #{tpu_custom_call.1} parent=11 // pred_check
          %p720 = pneg %p509
        $region78: #{tpu_custom_call.1} parent=11 // pred_check_branch
          %722 = sbr.rel (%p720) target = $region80
        $region79: #{tpu_custom_call.1} parent=11 // pred_region
          _
        $region80: #{tpu_custom_call.1} parent=11 // pred_fallthru
          _
        // Predicated region
        $region81: #{tpu_custom_call.1} parent=11 // pred_check
          %p723 = pneg %p530
        $region82: #{tpu_custom_call.1} parent=11 // pred_check_branch
          %725 = sbr.rel (%p723) target = $region84
        $region83: #{tpu_custom_call.1} parent=11 // pred_region
          _
        $region84: #{tpu_custom_call.1} parent=11 // pred_fallthru
          _
        // Predicated region
        $region85: #{tpu_custom_call.1} parent=11 // pred_check
          %p726 = pneg %p551
        $region86: #{tpu_custom_call.1} parent=11 // pred_check_branch
          %728 = sbr.rel (%p726) target = $region88
        $region87: #{tpu_custom_call.1} parent=11 // pred_region
          _
        $region88: #{tpu_custom_call.1} parent=11 // pred_fallthru
          _
        // Predicated region
        $region89: #{tpu_custom_call.1} parent=11 // pred_check
          %p729 = pneg %p572
        $region90: #{tpu_custom_call.1} parent=11 // pred_check_branch
          %731 = sbr.rel (%p729) target = $region92
        $region91: #{tpu_custom_call.1} parent=11 // pred_region
          _
        $region92: #{tpu_custom_call.1} parent=11 // pred_fallthru
          _
      $region12: #{tpu_custom_call.1} parent=5 // pred_fallthru
        _
      %p732 = scmp.lt.s32.totalorder %s48, 2
      // Predicated region
      $region93: #{tpu_custom_call.1} parent=5 // pred_check
        %p733 = pneg %p732
      $region94: #{tpu_custom_call.1} parent=5 // pred_check_branch
        %735 = sbr.rel (%p733) target = $region96
      $region95: #{tpu_custom_call.1} parent=5 // pred_region
        // Predicated region
        $region97: #{tpu_custom_call.1} parent=95 // pred_check
          %p736 = pneg %p68
        $region98: #{tpu_custom_call.1} parent=95 // pred_check_branch
          %738 = sbr.rel (%p736) target = $region100
        $region99: #{tpu_custom_call.1} parent=95 // pred_region
          %s739 = sand.u32 %s58, 1
          %s740 = scalar_lea.sflag [#allocation3], %s739
          %s741 = sand.u32 %s58, 1
          %s742 = smul.addr %s741, 8
          %s743 = scalar_lea.vmem [#allocation2], %s742
          %745 = vsyncadd %s740, 0
          %s746 = smul.addr %s48, 8
          %s747 = scalar_lea.hbm %s0, %s746
          %s749 = sshll.u32 %s747, 4
          %s750 = int_to_ptr.hbm [resolvable:$true] %s749
          %s751 = sshll.u32 %s743, 4
          %s752 = int_to_ptr.vmem [resolvable:$true] %s751
          %754 = dma.hbm_to_vmem [thread:$0]  %s750, 128, %s752, %s740
        $region100: #{tpu_custom_call.1} parent=95 // pred_fallthru
          _
        // Predicated region
        $region101: #{tpu_custom_call.1} parent=95 // pred_check
          %p755 = pneg %p94
        $region102: #{tpu_custom_call.1} parent=95 // pred_check_branch
          %757 = sbr.rel (%p755) target = $region104
        $region103: #{tpu_custom_call.1} parent=95 // pred_region
          %s758 = sand.u32 %s48, 1
          %s759 = scalar_lea.sflag [#allocation6], %s758
          %s760 = sand.u32 %s84, 1
          %s761 = smul.addr %s760, 8
          %s762 = scalar_lea.vmem [#allocation5], %s761
          %764 = vsyncadd %s759, 0
          %s765 = smul.addr %s48, 8
          %s766 = scalar_lea.hbm %s1, %s765
          %s768 = sshll.u32 %s766, 4
          %s769 = int_to_ptr.hbm [resolvable:$true] %s768
          %s770 = sshll.u32 %s762, 4
          %s771 = int_to_ptr.vmem [resolvable:$true] %s770
          %773 = dma.hbm_to_vmem [thread:$0]  %s769, 128, %s771, %s759
        $region104: #{tpu_custom_call.1} parent=95 // pred_fallthru
          _
        // Predicated region
        $region105: #{tpu_custom_call.1} parent=95 // pred_check
          %p774 = pneg %p120
        $region106: #{tpu_custom_call.1} parent=95 // pred_check_branch
          %776 = sbr.rel (%p774) target = $region108
        $region107: #{tpu_custom_call.1} parent=95 // pred_region
          %s777 = sand.u32 %s48, 1
          %s778 = scalar_lea.sflag [#allocation6], %s777
          %s779 = sand.u32 %s110, 1
          %s780 = scalar_lea.vmem [#allocation7], %s779
          %782 = vsyncadd %s778, 0
          %s783 = scalar_lea.hbm %s2, %s48
          %s785 = sshll.u32 %s783, 4
          %s786 = int_to_ptr.hbm [resolvable:$true] %s785
          %s787 = sshll.u32 %s780, 4
          %s788 = int_to_ptr.vmem [resolvable:$true] %s787
          %790 = dma.hbm_to_vmem [thread:$0]  %s786, 16, %s788, %s778
        $region108: #{tpu_custom_call.1} parent=95 // pred_fallthru
          _
        // Predicated region
        $region109: #{tpu_custom_call.1} parent=95 // pred_check
          %p791 = pneg %p146
        $region110: #{tpu_custom_call.1} parent=95 // pred_check_branch
          %793 = sbr.rel (%p791) target = $region112
        $region111: #{tpu_custom_call.1} parent=95 // pred_region
          %s794 = sand.u32 %s48, 1
          %s795 = scalar_lea.sflag [#allocation9], %s794
          %s796 = sand.u32 %s136, 1
          %s797 = scalar_lea.vmem [#allocation8], %s796
          %799 = vsyncadd %s795, 0
          %s800 = scalar_lea.hbm %s3, %s48
          %s802 = sshll.u32 %s800, 4
          %s803 = int_to_ptr.hbm [resolvable:$true] %s802
          %s804 = sshll.u32 %s797, 4
          %s805 = int_to_ptr.vmem [resolvable:$true] %s804
          %807 = dma.hbm_to_vmem [thread:$0]  %s803, 16, %s805, %s795
        $region112: #{tpu_custom_call.1} parent=95 // pred_fallthru
          _
      $region96: #{tpu_custom_call.1} parent=5 // pred_fallthru
        _
      %p808 = scmp.le.s32.totalorder 1, %s48
      %p809 = scmp.lt.s32.totalorder %s48, 3
      %p810 = pnand %p808, %p809
      %p811 = pneg %p810
      // Predicated region
      $region113: #{tpu_custom_call.1} parent=5 // pred_check
        _
      $region114: #{tpu_custom_call.1} parent=5 // pred_check_branch
        %813 = sbr.rel (%p810) target = $region116
      $region115: #{tpu_custom_call.1} parent=5 // pred_region
        %s814 = ssub.s32 %s48, 1
        %s815 = sand.u32 %s61, 1
        %s816 = scalar_lea.sflag [#allocation3], %s815
        %s817 = sand.u32 %s61, 1
        %s818 = smul.addr %s817, 8
        %s819 = scalar_lea.vmem [#allocation2], %s818
        // Predicated region
        $region117: #{tpu_custom_call.1} parent=115 // pred_check
          %p820 = pneg %p74
        $region118: #{tpu_custom_call.1} parent=115 // pred_check_branch
          %822 = sbr.rel (%p820) target = $region120
        $region119: #{tpu_custom_call.1} parent=115 // pred_region
          %824 = dma.done %s816, 128
        $region120: #{tpu_custom_call.1} parent=115 // pred_fallthru
          _
        %s825 = sand.u32 %s53, 1
        %s826 = scalar_lea.sflag [#allocation6], %s825
        %s827 = sand.u32 %s87, 1
        %s828 = smul.addr %s827, 8
        %s829 = scalar_lea.vmem [#allocation5], %s828
        // Predicated region
        $region121: #{tpu_custom_call.1} parent=115 // pred_check
          %p830 = pneg %p100
        $region122: #{tpu_custom_call.1} parent=115 // pred_check_branch
          %832 = sbr.rel (%p830) target = $region124
        $region123: #{tpu_custom_call.1} parent=115 // pred_region
          %834 = dma.done %s826, 128
        $region124: #{tpu_custom_call.1} parent=115 // pred_fallthru
          _
        %s835 = sand.u32 %s53, 1
        %s836 = scalar_lea.sflag [#allocation6], %s835
        %s837 = sand.u32 %s113, 1
        %s838 = scalar_lea.vmem [#allocation7], %s837
        // Predicated region
        $region125: #{tpu_custom_call.1} parent=115 // pred_check
          %p839 = pneg %p126
        $region126: #{tpu_custom_call.1} parent=115 // pred_check_branch
          %841 = sbr.rel (%p839) target = $region128
        $region127: #{tpu_custom_call.1} parent=115 // pred_region
          %843 = dma.done %s836, 16
        $region128: #{tpu_custom_call.1} parent=115 // pred_fallthru
          _
        %s844 = sand.u32 %s53, 1
        %s845 = scalar_lea.sflag [#allocation9], %s844
        %s846 = sand.u32 %s139, 1
        %s847 = scalar_lea.vmem [#allocation8], %s846
        // Predicated region
        $region129: #{tpu_custom_call.1} parent=115 // pred_check
          %p848 = pneg %p152
        $region130: #{tpu_custom_call.1} parent=115 // pred_check_branch
          %850 = sbr.rel (%p848) target = $region132
        $region131: #{tpu_custom_call.1} parent=115 // pred_region
          %852 = dma.done %s845, 16
        $region132: #{tpu_custom_call.1} parent=115 // pred_fallthru
          _
        // Predicated region
        $region133: #{tpu_custom_call.1} parent=115 // pred_check
          %p853 = pneg %p299
        $region134: #{tpu_custom_call.1} parent=115 // pred_check_branch
          %855 = sbr.rel (%p853) target = $region136
        $region135: #{tpu_custom_call.1} parent=115 // pred_region
          %857 = dma.done [#allocation9], 512
        $region136: #{tpu_custom_call.1} parent=115 // pred_fallthru
          _
        // Predicated region
        $region137: #{tpu_custom_call.1} parent=115 // pred_check
          %p858 = pneg %p341
        $region138: #{tpu_custom_call.1} parent=115 // pred_check_branch
          %860 = sbr.rel (%p858) target = $region140
        $region139: #{tpu_custom_call.1} parent=115 // pred_region
          %862 = dma.done [#allocation12], 512
        $region140: #{tpu_custom_call.1} parent=115 // pred_fallthru
          _
        // Predicated region
        $region141: #{tpu_custom_call.1} parent=115 // pred_check
          %p863 = pneg %p383
        $region142: #{tpu_custom_call.1} parent=115 // pred_check_branch
          %865 = sbr.rel (%p863) target = $region144
        $region143: #{tpu_custom_call.1} parent=115 // pred_region
          %867 = dma.done [#allocation12], 512
        $region144: #{tpu_custom_call.1} parent=115 // pred_fallthru
          _
        %s868 = sand.u32 %s61, 1
        %s869 = scalar_lea.sflag [#allocation3], %s868
        %s870 = sand.u32 %s61, 1
        %s871 = smul.addr %s870, 8
        %s872 = scalar_lea.vmem [#allocation2], %s871
        %p873 = pneg %p74
        %p874 = pneg %p71
        %s875 = sand.u32 %s53, 1
        %s876 = scalar_lea.sflag [#allocation6], %s875
        %s877 = sand.u32 %s87, 1
        %s878 = smul.addr %s877, 8
        %s879 = scalar_lea.vmem [#allocation5], %s878
        %p880 = pneg %p100
        %p881 = pneg %p97
        %s882 = sand.u32 %s53, 1
        %s883 = scalar_lea.sflag [#allocation6], %s882
        %s884 = sand.u32 %s113, 1
        %s885 = scalar_lea.vmem [#allocation7], %s884
        %p886 = pneg %p126
        %p887 = pneg %p123
        %s888 = sand.u32 %s53, 1
        %s889 = scalar_lea.sflag [#allocation9], %s888
        %s890 = sand.u32 %s139, 1
        %s891 = scalar_lea.vmem [#allocation8], %s890
        %p892 = pneg %p152
        %p893 = pneg %p149
        %p894 = pneg %p173
        %p895 = pneg %p170
        %p896 = pneg %p194
        %p897 = pneg %p191
        %p898 = pneg %p215
        %p899 = pneg %p212
        %p900 = pneg %p236
        %p901 = pneg %p233
        %p902 = pneg %p257
        %p903 = pneg %p254
        %p904 = pneg %p278
        %p905 = pneg %p275
        %p906 = pneg %p299
        %p907 = pneg %p296
        %p908 = pneg %p320
        %p909 = pneg %p317
        %p910 = pneg %p341
        %p911 = pneg %p338
        %p912 = pneg %p362
        %p913 = pneg %p359
        %p914 = pneg %p383
        %p915 = pneg %p380
        %p916 = pneg %p404
        %p917 = pneg %p401
        %p918 = pneg %p425
        %p919 = pneg %p422
        %p920 = pneg %p446
        %p921 = pneg %p443
        %p922 = pneg %p467
        %p923 = pneg %p464
        %p924 = pneg %p488
        %p925 = pneg %p485
        %p926 = pneg %p509
        %p927 = pneg %p506
        %p928 = pneg %p530
        %p929 = pneg %p527
        %p930 = pneg %p551
        %p931 = pneg %p548
        %p932 = pneg %p572
        %p933 = pneg %p569
        %p934 = pneg %p598
        %p935 = pneg %p595
        %s936 = sand.u32 %s585, 1
        %s937 = scalar_lea.sflag [#allocation4], %s936
        %s938 = sand.u32 %s585, 1
        %s939 = smul.addr %s938, 8
        %s940 = scalar_lea.vmem [#allocation14], %s939
        %p941 = pneg %p624
        %p942 = pneg %p621
        %s943 = sand.u32 %s611, 1
        %s944 = scalar_lea.sflag [#allocation16], %s943
        %s945 = sand.u32 %s611, 1
        %s946 = smul.addr %s945, 8
        %s947 = scalar_lea.vmem [#allocation15], %s946
        %v948 = vld [vmem:[%s819] sm:$0xff]
        %v949 = vld [vmem:[%s829] sm:$0xff]
        %v950 = vld [vmem:[%s838] sm:$0x1]
        %v951 = vld [vmem:[%s847] sm:$0x1]
        %v952 = vld [vmem:[%s4] sm:$0xff]
        %v953 = vld [vmem:[%s4 + $0x8] sm:$0xff]
        %v954 = vld [vmem:[%s4 + $0x10] sm:$0xff]
        %v955 = vld [vmem:[%s4 + $0x18] sm:$0xff]
        %v956 = vld [vmem:[%s5] sm:$0x1]
        %v958 = vperm.slane %v956, 0
        %vm960 = vcmask 261120
        %v962 = vsel %vm960, %v948, 0
        %964 = vmatpush.msra.mxu0 0.0
        %965 = vmatpush.msra.mxu0 0.0
        %966 = vmatpush.msra.mxu0 0.0
        %967 = vmatpush.msra.mxu0 0.0
        %968 = vmatpush.msra.mxu0 0.0
        %969 = vmatpush.msra.mxu0 0.0
        %970 = vmatpush.msra.mxu0 0.0
        %971 = vmatpush.msra.mxu0 0.0
        %972 = vmatpush.msra.mxu0 0.0
        %973 = vmatpush.msra.mxu0 0.0
        %974 = vmatpush.msra.mxu0 0.0
        %975 = vmatpush.msra.mxu0 0.0
        %976 = vmatpush.msra.mxu0 %v955
        %977 = vmatpush.msra.mxu0 %v954
        %978 = vmatpush.msra.mxu0 %v953
        %979 = vmatpush.msra.mxu0 %v952
        %980 = vmatmul.f32.gmra.mxu0 %v962
        %v981 = vpop.f32.mrf.mxu0
        %v982 = vadd.f32 %v958, %v981
        %983 = vdwg.mxu0
        %v984 = vld [vmem:[%s7] sm:$0x1]
        %v986 = vperm.slane %v950, 0
        %989 = vrot.lane.b32.xlu0 %v982, 96
        %v990 = vpop.permute.xlu0 %989
        %vm991 = vcmask 64512
        %v992 = vsel %vm991, %v982, 0
        %v994 = vsel %vm991, %v990, 0
        %996 = vmatpush.xpose.msra.mxu0 0.0
        %997 = vmatpush.xpose.msra.mxu0 0.0
        %998 = vmatpush.xpose.msra.mxu0 0.0
        %999 = vmatpush.xpose.msra.mxu0 0.0
        %1000 = vmatpush.xpose.msra.mxu0 0.0
        %1001 = vmatpush.xpose.msra.mxu0 0.0
        %1002 = vmatpush.xpose.msra.mxu0 0.0
        %1003 = vmatpush.xpose.msra.mxu0 0.0
        %1004 = vmatpush.xpose.msra.mxu0 0.0
        %1005 = vmatpush.xpose.msra.mxu0 0.0
        %1006 = vmatpush.xpose.msra.mxu0 0.0
        %1007 = vmatpush.xpose.msra.mxu0 0.0
        %1008 = vmatpush.xpose.msra.mxu0 0.0
        %1009 = vmatpush.xpose.msra.mxu0 0.0
        %1010 = vmatpush.xpose.msra.mxu0 0.0
        %1011 = vmatpush.xpose.msra.mxu0 %v994
        %1012 = vmatmul.f32.gmra.mxu0 %v992
        %v1013 = vpop.f32.mrf.mxu0
        %v1014 = vadd.f32 %v986, %v1013
        %1015 = vdwg.mxu0
        %v1016 = vsel %vm991, %v1014, -inf
        %1017 = vmax.xlane.f32.xlu0 %v1016
        %v1018 = vpop.xlane.xlu0 %1017
        %v1019 = vsub.f32 %v1014, %v1018
        %v1020 = vmul.f32 %v1019, 1.442695
        %v1021 = vpow.pop %v1020
        %v1022 = vsel %vm991, %v1021, 0.0
        %1023 = vadd.xlane.f32.xlu0 %v1022
        %v1024 = vpop.xlane.xlu0 %1023
        %v1025 = vrcp.pop %v1024
        %v1026 = vmul.f32 %v1024, %v1025
        %v1027 = vsub.f32 1.0, %v1026
        %v1028 = vmul.f32 %v1025, %v1027
        %v1029 = vadd.f32 %v1025, %v1028
        %vm1030 = vweird.f32 %v1024
        %vm1031 = vweird.f32 %v1025
        %vm1032 = vmor %vm1030, %vm1031
        %v1033 = vsel %vm1032, %v1025, %v1029
        %v1034 = vand.u32 2147483647, %v1024
        %vm1035 = vcmp.eq.f32.partialorder %v1034, 8.507059e+37
        %v1036 = vand.u32 %v1024, 2147483648
        %v1037 = vor.u32 1.1754944e-38, %v1036
        %v1038 = vsel %vm1035, %v1037, %v1033
        %v1039 = vmul.f32 %v1021, %v1038
        %1040 = vrot.lane.b32.xlu0 %v982, 64
        %v1041 = vpop.permute.xlu0 %1040
        %v1044 = vsel %vm991, %v1039, 0
        %1046 = vmatpush.msra.mxu0 0.0
        %1047 = vmatpush.msra.mxu0 0.0
        %1048 = vmatpush.msra.mxu0 0.0
        %1049 = vmatpush.msra.mxu0 0.0
        %1050 = vmatpush.msra.mxu0 0.0
        %1051 = vmatpush.msra.mxu0 0.0
        %1052 = vmatpush.msra.mxu0 0.0
        %1053 = vmatpush.msra.mxu0 0.0
        %1054 = vmatpush.msra.mxu0 0.0
        %1055 = vmatpush.msra.mxu0 0.0
        %1056 = vmatpush.msra.mxu0 0.0
        %1057 = vmatpush.msra.mxu0 0.0
        %1058 = vmatpush.msra.mxu0 0.0
        %1059 = vmatpush.msra.mxu0 0.0
        %1060 = vmatpush.msra.mxu0 0.0
        %1061 = vmatpush.msra.mxu0 %v1041
        %1062 = vmatmul.f32.gmra.mxu0 %v1044
        %v1063 = vpop.f32.mrf.mxu0
        %v1064 = vadd.f32 0.0, %v1063
        %1065 = vdwg.mxu0
        %v1066 = vld [vmem:[%s6] sm:$0xff]
        %1067 = vrot.lane.b32.xlu0 %v982, 120
        %v1068 = vpop.permute.xlu0 %1067
        %1069 = vrot.lane.b32.xlu0 %v982, 88
        %v1070 = vpop.permute.xlu0 %1069
        %v1071 = vsel %vm991, %v1068, 0
        %v1073 = vsel %vm991, %v1070, 0
        %1075 = vmatpush.xpose.msra.mxu0 0.0
        %1076 = vmatpush.xpose.msra.mxu0 0.0
        %1077 = vmatpush.xpose.msra.mxu0 0.0
        %1078 = vmatpush.xpose.msra.mxu0 0.0
        %1079 = vmatpush.xpose.msra.mxu0 0.0
        %1080 = vmatpush.xpose.msra.mxu0 0.0
        %1081 = vmatpush.xpose.msra.mxu0 0.0
        %1082 = vmatpush.xpose.msra.mxu0 0.0
        %1083 = vmatpush.xpose.msra.mxu0 0.0
        %1084 = vmatpush.xpose.msra.mxu0 0.0
        %1085 = vmatpush.xpose.msra.mxu0 0.0
        %1086 = vmatpush.xpose.msra.mxu0 0.0
        %1087 = vmatpush.xpose.msra.mxu0 0.0
        %1088 = vmatpush.xpose.msra.mxu0 0.0
        %1089 = vmatpush.xpose.msra.mxu0 0.0
        %1090 = vmatpush.xpose.msra.mxu0 %v1073
        %1091 = vmatmul.f32.gmra.mxu0 %v1071
        %v1092 = vpop.f32.mrf.mxu0
        %v1093 = vadd.f32 %v986, %v1092
        %1094 = vdwg.mxu0
        %v1095 = vsel %vm991, %v1093, -inf
        %1096 = vmax.xlane.f32.xlu0 %v1095
        %v1097 = vpop.xlane.xlu0 %1096
        %v1098 = vsub.f32 %v1093, %v1097
        %v1099 = vmul.f32 %v1098, 1.442695
        %v1100 = vpow.pop %v1099
        %v1101 = vsel %vm991, %v1100, 0.0
        %1102 = vadd.xlane.f32.xlu0 %v1101
        %v1103 = vpop.xlane.xlu0 %1102
        %v1104 = vrcp.pop %v1103
        %v1105 = vmul.f32 %v1103, %v1104
        %v1106 = vsub.f32 1.0, %v1105
        %v1107 = vmul.f32 %v1104, %v1106
        %v1108 = vadd.f32 %v1104, %v1107
        %vm1109 = vweird.f32 %v1103
        %vm1110 = vweird.f32 %v1104
        %vm1111 = vmor %vm1109, %vm1110
        %v1112 = vsel %vm1111, %v1104, %v1108
        %v1113 = vand.u32 2147483647, %v1103
        %vm1114 = vcmp.eq.f32.partialorder %v1113, 8.507059e+37
        %v1115 = vand.u32 %v1103, 2147483648
        %v1116 = vor.u32 1.1754944e-38, %v1115
        %v1117 = vsel %vm1114, %v1116, %v1112
        %v1118 = vmul.f32 %v1100, %v1117
        %1119 = vrot.lane.b32.xlu0 %v982, 56
        %v1120 = vpop.permute.xlu0 %1119
        %v1123 = vsel %vm991, %v1118, 0
        %1125 = vmatpush.msra.mxu0 0.0
        %1126 = vmatpush.msra.mxu0 0.0
        %1127 = vmatpush.msra.mxu0 0.0
        %1128 = vmatpush.msra.mxu0 0.0
        %1129 = vmatpush.msra.mxu0 0.0
        %1130 = vmatpush.msra.mxu0 0.0
        %1131 = vmatpush.msra.mxu0 0.0
        %1132 = vmatpush.msra.mxu0 0.0
        %1133 = vmatpush.msra.mxu0 0.0
        %1134 = vmatpush.msra.mxu0 0.0
        %1135 = vmatpush.msra.mxu0 0.0
        %1136 = vmatpush.msra.mxu0 0.0
        %1137 = vmatpush.msra.mxu0 0.0
        %1138 = vmatpush.msra.mxu0 0.0
        %1139 = vmatpush.msra.mxu0 0.0
        %1140 = vmatpush.msra.mxu0 %v1120
        %1141 = vmatmul.f32.gmra.mxu0 %v1123
        %v1142 = vpop.f32.mrf.mxu0
        %v1143 = vadd.f32 0.0, %v1142
        %1144 = vdwg.mxu0
        %v1145 = vld [vmem:[%s6 + $0x8] sm:$0xff]
        %v1147 = vsel %vm991, %v1143, 0
        %1149 = vmatpush.msra.mxu0 0.0
        %1150 = vmatpush.msra.mxu0 0.0
        %1151 = vmatpush.msra.mxu0 0.0
        %1152 = vmatpush.msra.mxu0 0.0
        %1153 = vmatpush.msra.mxu0 0.0
        %1154 = vmatpush.msra.mxu0 0.0
        %1155 = vmatpush.msra.mxu0 0.0
        %1156 = vmatpush.msra.mxu0 0.0
        %1157 = vmatpush.msra.mxu0 0.0
        %1158 = vmatpush.msra.mxu0 0.0
        %1159 = vmatpush.msra.mxu0 0.0
        %1160 = vmatpush.msra.mxu0 0.0
        %1161 = vmatpush.msra.mxu0 0.0
        %1162 = vmatpush.msra.mxu0 0.0
        %1163 = vmatpush.msra.mxu0 0.0
        %1164 = vmatpush.msra.mxu0 %v1145
        %1165 = vmatmul.f32.gmra.mxu0 %v1147
        %v1166 = vpop.f32.mrf.mxu0
        %v1167 = vadd.f32 0.0, %v1166
        %1168 = vdwg.mxu0
        %v1170 = vsel %vm991, %v1064, 0
        %1172 = vmatpush.msra.mxu0 0.0
        %1173 = vmatpush.msra.mxu0 0.0
        %1174 = vmatpush.msra.mxu0 0.0
        %1175 = vmatpush.msra.mxu0 0.0
        %1176 = vmatpush.msra.mxu0 0.0
        %1177 = vmatpush.msra.mxu0 0.0
        %1178 = vmatpush.msra.mxu0 0.0
        %1179 = vmatpush.msra.mxu0 0.0
        %1180 = vmatpush.msra.mxu0 0.0
        %1181 = vmatpush.msra.mxu0 0.0
        %1182 = vmatpush.msra.mxu0 0.0
        %1183 = vmatpush.msra.mxu0 0.0
        %1184 = vmatpush.msra.mxu0 0.0
        %1185 = vmatpush.msra.mxu0 0.0
        %1186 = vmatpush.msra.mxu0 0.0
        %1187 = vmatpush.msra.mxu0 %v1066
        %1188 = vmatmul.f32.gmra.mxu0 %v1170
        %v1189 = vpop.f32.mrf.mxu0
        %v1190 = vadd.f32 %v1167, %v1189
        %1191 = vdwg.mxu0
        %1192 = vrot.lane.b32.xlu0 %v982, 112
        %v1193 = vpop.permute.xlu0 %1192
        %1194 = vrot.lane.b32.xlu0 %v982, 80
        %v1195 = vpop.permute.xlu0 %1194
        %v1196 = vsel %vm991, %v1193, 0
        %v1198 = vsel %vm991, %v1195, 0
        %1200 = vmatpush.xpose.msra.mxu0 0.0
        %1201 = vmatpush.xpose.msra.mxu0 0.0
        %1202 = vmatpush.xpose.msra.mxu0 0.0
        %1203 = vmatpush.xpose.msra.mxu0 0.0
        %1204 = vmatpush.xpose.msra.mxu0 0.0
        %1205 = vmatpush.xpose.msra.mxu0 0.0
        %1206 = vmatpush.xpose.msra.mxu0 0.0
        %1207 = vmatpush.xpose.msra.mxu0 0.0
        %1208 = vmatpush.xpose.msra.mxu0 0.0
        %1209 = vmatpush.xpose.msra.mxu0 0.0
        %1210 = vmatpush.xpose.msra.mxu0 0.0
        %1211 = vmatpush.xpose.msra.mxu0 0.0
        %1212 = vmatpush.xpose.msra.mxu0 0.0
        %1213 = vmatpush.xpose.msra.mxu0 0.0
        %1214 = vmatpush.xpose.msra.mxu0 0.0
        %1215 = vmatpush.xpose.msra.mxu0 %v1198
        %1216 = vmatmul.f32.gmra.mxu0 %v1196
        %v1217 = vpop.f32.mrf.mxu0
        %v1218 = vadd.f32 %v986, %v1217
        %1219 = vdwg.mxu0
        %v1220 = vsel %vm991, %v1218, -inf
        %1221 = vmax.xlane.f32.xlu0 %v1220
        %v1222 = vpop.xlane.xlu0 %1221
        %v1223 = vsub.f32 %v1218, %v1222
        %v1224 = vmul.f32 %v1223, 1.442695
        %v1225 = vpow.pop %v1224
        %v1226 = vsel %vm991, %v1225, 0.0
        %1227 = vadd.xlane.f32.xlu0 %v1226
        %v1228 = vpop.xlane.xlu0 %1227
        %v1229 = vrcp.pop %v1228
        %v1230 = vmul.f32 %v1228, %v1229
        %v1231 = vsub.f32 1.0, %v1230
        %v1232 = vmul.f32 %v1229, %v1231
        %v1233 = vadd.f32 %v1229, %v1232
        %vm1234 = vweird.f32 %v1228
        %vm1235 = vweird.f32 %v1229
        %vm1236 = vmor %vm1234, %vm1235
        %v1237 = vsel %vm1236, %v1229, %v1233
        %v1238 = vand.u32 2147483647, %v1228
        %vm1239 = vcmp.eq.f32.partialorder %v1238, 8.507059e+37
        %v1240 = vand.u32 %v1228, 2147483648
        %v1241 = vor.u32 1.1754944e-38, %v1240
        %v1242 = vsel %vm1239, %v1241, %v1237
        %v1243 = vmul.f32 %v1225, %v1242
        %1244 = vrot.lane.b32.xlu0 %v982, 48
        %v1245 = vpop.permute.xlu0 %1244
        %v1248 = vsel %vm991, %v1243, 0
        %1250 = vmatpush.msra.mxu0 0.0
        %1251 = vmatpush.msra.mxu0 0.0
        %1252 = vmatpush.msra.mxu0 0.0
        %1253 = vmatpush.msra.mxu0 0.0
        %1254 = vmatpush.msra.mxu0 0.0
        %1255 = vmatpush.msra.mxu0 0.0
        %1256 = vmatpush.msra.mxu0 0.0
        %1257 = vmatpush.msra.mxu0 0.0
        %1258 = vmatpush.msra.mxu0 0.0
        %1259 = vmatpush.msra.mxu0 0.0
        %1260 = vmatpush.msra.mxu0 0.0
        %1261 = vmatpush.msra.mxu0 0.0
        %1262 = vmatpush.msra.mxu0 0.0
        %1263 = vmatpush.msra.mxu0 0.0
        %1264 = vmatpush.msra.mxu0 0.0
        %1265 = vmatpush.msra.mxu0 %v1245
        %1266 = vmatmul.f32.gmra.mxu0 %v1248
        %v1267 = vpop.f32.mrf.mxu0
        %v1268 = vadd.f32 0.0, %v1267
        %1269 = vdwg.mxu0
        %v1270 = vld [vmem:[%s6 + $0x10] sm:$0xff]
        %v1272 = vsel %vm991, %v1268, 0
        %1274 = vmatpush.msra.mxu0 0.0
        %1275 = vmatpush.msra.mxu0 0.0
        %1276 = vmatpush.msra.mxu0 0.0
        %1277 = vmatpush.msra.mxu0 0.0
        %1278 = vmatpush.msra.mxu0 0.0
        %1279 = vmatpush.msra.mxu0 0.0
        %1280 = vmatpush.msra.mxu0 0.0
        %1281 = vmatpush.msra.mxu0 0.0
        %1282 = vmatpush.msra.mxu0 0.0
        %1283 = vmatpush.msra.mxu0 0.0
        %1284 = vmatpush.msra.mxu0 0.0
        %1285 = vmatpush.msra.mxu0 0.0
        %1286 = vmatpush.msra.mxu0 0.0
        %1287 = vmatpush.msra.mxu0 0.0
        %1288 = vmatpush.msra.mxu0 0.0
        %1289 = vmatpush.msra.mxu0 %v1270
        %1290 = vmatmul.f32.gmra.mxu0 %v1272
        %v1291 = vpop.f32.mrf.mxu0
        %v1292 = vadd.f32 0.0, %v1291
        %1293 = vdwg.mxu0
        %v1294 = vadd.f32 %v1190, %v1292
        %1295 = vrot.lane.b32.xlu0 %v982, 104
        %v1296 = vpop.permute.xlu0 %1295
        %1297 = vrot.lane.b32.xlu0 %v982, 72
        %v1298 = vpop.permute.xlu0 %1297
        %v1299 = vsel %vm991, %v1296, 0
        %v1301 = vsel %vm991, %v1298, 0
        %1303 = vmatpush.xpose.msra.mxu0 0.0
        %1304 = vmatpush.xpose.msra.mxu0 0.0
        %1305 = vmatpush.xpose.msra.mxu0 0.0
        %1306 = vmatpush.xpose.msra.mxu0 0.0
        %1307 = vmatpush.xpose.msra.mxu0 0.0
        %1308 = vmatpush.xpose.msra.mxu0 0.0
        %1309 = vmatpush.xpose.msra.mxu0 0.0
        %1310 = vmatpush.xpose.msra.mxu0 0.0
        %1311 = vmatpush.xpose.msra.mxu0 0.0
        %1312 = vmatpush.xpose.msra.mxu0 0.0
        %1313 = vmatpush.xpose.msra.mxu0 0.0
        %1314 = vmatpush.xpose.msra.mxu0 0.0
        %1315 = vmatpush.xpose.msra.mxu0 0.0
        %1316 = vmatpush.xpose.msra.mxu0 0.0
        %1317 = vmatpush.xpose.msra.mxu0 0.0
        %1318 = vmatpush.xpose.msra.mxu0 %v1301
        %1319 = vmatmul.f32.gmra.mxu0 %v1299
        %v1320 = vpop.f32.mrf.mxu0
        %v1321 = vadd.f32 %v986, %v1320
        %1322 = vdwg.mxu0
        %v1323 = vsel %vm991, %v1321, -inf
        %1324 = vmax.xlane.f32.xlu0 %v1323
        %v1325 = vpop.xlane.xlu0 %1324
        %v1326 = vsub.f32 %v1321, %v1325
        %v1327 = vmul.f32 %v1326, 1.442695
        %v1328 = vpow.pop %v1327
        %v1329 = vsel %vm991, %v1328, 0.0
        %1330 = vadd.xlane.f32.xlu0 %v1329
        %v1331 = vpop.xlane.xlu0 %1330
        %v1332 = vrcp.pop %v1331
        %v1333 = vmul.f32 %v1331, %v1332
        %v1334 = vsub.f32 1.0, %v1333
        %v1335 = vmul.f32 %v1332, %v1334
        %v1336 = vadd.f32 %v1332, %v1335
        %vm1337 = vweird.f32 %v1331
        %vm1338 = vweird.f32 %v1332
        %vm1339 = vmor %vm1337, %vm1338
        %v1340 = vsel %vm1339, %v1332, %v1336
        %v1341 = vand.u32 2147483647, %v1331
        %vm1342 = vcmp.eq.f32.partialorder %v1341, 8.507059e+37
        %v1343 = vand.u32 %v1331, 2147483648
        %v1344 = vor.u32 1.1754944e-38, %v1343
        %v1345 = vsel %vm1342, %v1344, %v1340
        %v1346 = vmul.f32 %v1328, %v1345
        %1347 = vrot.lane.b32.xlu0 %v982, 40
        %v1348 = vpop.permute.xlu0 %1347
        %v1351 = vsel %vm991, %v1346, 0
        %1353 = vmatpush.msra.mxu0 0.0
        %1354 = vmatpush.msra.mxu0 0.0
        %1355 = vmatpush.msra.mxu0 0.0
        %1356 = vmatpush.msra.mxu0 0.0
        %1357 = vmatpush.msra.mxu0 0.0
        %1358 = vmatpush.msra.mxu0 0.0
        %1359 = vmatpush.msra.mxu0 0.0
        %1360 = vmatpush.msra.mxu0 0.0
        %1361 = vmatpush.msra.mxu0 0.0
        %1362 = vmatpush.msra.mxu0 0.0
        %1363 = vmatpush.msra.mxu0 0.0
        %1364 = vmatpush.msra.mxu0 0.0
        %1365 = vmatpush.msra.mxu0 0.0
        %1366 = vmatpush.msra.mxu0 0.0
        %1367 = vmatpush.msra.mxu0 0.0
        %1368 = vmatpush.msra.mxu0 %v1348
        %1369 = vmatmul.f32.gmra.mxu0 %v1351
        %v1370 = vpop.f32.mrf.mxu0
        %v1371 = vadd.f32 0.0, %v1370
        %1372 = vdwg.mxu0
        %v1373 = vld [vmem:[%s6 + $0x18] sm:$0xff]
        %v1375 = vsel %vm991, %v1371, 0
        %1377 = vmatpush.msra.mxu0 0.0
        %1378 = vmatpush.msra.mxu0 0.0
        %1379 = vmatpush.msra.mxu0 0.0
        %1380 = vmatpush.msra.mxu0 0.0
        %1381 = vmatpush.msra.mxu0 0.0
        %1382 = vmatpush.msra.mxu0 0.0
        %1383 = vmatpush.msra.mxu0 0.0
        %1384 = vmatpush.msra.mxu0 0.0
        %1385 = vmatpush.msra.mxu0 0.0
        %1386 = vmatpush.msra.mxu0 0.0
        %1387 = vmatpush.msra.mxu0 0.0
        %1388 = vmatpush.msra.mxu0 0.0
        %1389 = vmatpush.msra.mxu0 0.0
        %1390 = vmatpush.msra.mxu0 0.0
        %1391 = vmatpush.msra.mxu0 0.0
        %1392 = vmatpush.msra.mxu0 %v1373
        %1393 = vmatmul.f32.gmra.mxu0 %v1375
        %v1394 = vpop.f32.mrf.mxu0
        %v1395 = vadd.f32 0.0, %v1394
        %1396 = vdwg.mxu0
        %v1397 = vadd.f32 %v1294, %v1395
        %v1399 = vperm.slane %v984, 0
        %v1401 = vadd.f32 %v1397, %v1399
        %v1402 = vadd.f32 %v948, %v1401
        %v1403 = vld [vmem:[%s18] sm:$0x1]
        %v1404 = vld [vmem:[%s19] sm:$0x1]
        %v1405 = vsel %vm960, %v1402, 0.0
        %1406 = vadd.xlane.f32.xlu0 %v1405
        %v1407 = vpop.xlane.xlu0 %1406
        %v1408 = vrcp.pop 32.0
        %v1409 = vmul.f32 32.0, %v1408
        %v1410 = vsub.f32 1.0, %v1409
        %v1411 = vmul.f32 %v1408, %v1410
        %v1412 = vadd.f32 %v1408, %v1411
        %vm1413 = vweird.f32 %v1408
        %v1414 = vsel %vm1413, %v1408, %v1412
        %v1415 = vmul.f32 %v1407, %v1414
        %v1416 = vsub.f32 %v1402, %v1415
        %v1417 = vmul.f32 %v1416, %v1416
        %v1418 = vsel %vm960, %v1417, 0.0
        %1419 = vadd.xlane.f32.xlu0 %v1418
        %v1420 = vpop.xlane.xlu0 %1419
        %v1421 = vmul.f32 %v1420, %v1414
        %v1422 = vadd.f32 %v1421, 1e-05
        %v1423 = vrsqrt.pop %v1422
        %v1424 = vmul.f32 %v1423, %v1422
        %v1425 = vmul.f32 %v1424, %v1423
        %v1426 = vmul.f32 0.5, %v1425
        %v1427 = vsub.f32 1.5, %v1426
        %v1428 = vmul.f32 %v1423, %v1427
        %vm1429 = vweird.f32 %v1422
        %vm1430 = vweird.f32 %v1423
        %vm1431 = vmor %vm1429, %vm1430
        %v1432 = vsel %vm1431, %v1423, %v1428
        %v1433 = vmul.f32 %v1416, %v1432
        %v1435 = vperm.slane %v1403, 0
        %v1437 = vmul.f32 %v1433, %v1435
        %v1439 = vperm.slane %v1404, 0
        %v1441 = vadd.f32 %v1437, %v1439
        %v1442 = vld [vmem:[%s8] sm:$0xff]
        %v1443 = vld [vmem:[%s8 + $0x8] sm:$0xff]
        %v1444 = vld [vmem:[%s8 + $0x10] sm:$0xff]
        %v1445 = vld [vmem:[%s8 + $0x18] sm:$0xff]
        %v1446 = vld [vmem:[%s9] sm:$0x1]
        %v1448 = vperm.slane %v1446, 0
        %v1451 = vsel %vm960, %v1441, 0
        %1453 = vmatpush.msra.mxu0 0.0
        %1454 = vmatpush.msra.mxu0 0.0
        %1455 = vmatpush.msra.mxu0 0.0
        %1456 = vmatpush.msra.mxu0 0.0
        %1457 = vmatpush.msra.mxu0 0.0
        %1458 = vmatpush.msra.mxu0 0.0
        %1459 = vmatpush.msra.mxu0 0.0
        %1460 = vmatpush.msra.mxu0 0.0
        %1461 = vmatpush.msra.mxu0 0.0
        %1462 = vmatpush.msra.mxu0 0.0
        %1463 = vmatpush.msra.mxu0 0.0
        %1464 = vmatpush.msra.mxu0 0.0
        %1465 = vmatpush.msra.mxu0 %v1445
        %1466 = vmatpush.msra.mxu0 %v1444
        %1467 = vmatpush.msra.mxu0 %v1443
        %1468 = vmatpush.msra.mxu0 %v1442
        %1469 = vmatmul.f32.gmra.mxu0 %v1451
        %v1470 = vpop.f32.mrf.mxu0
        %v1471 = vadd.f32 %v1448, %v1470
        %1472 = vdwg.mxu0
        %v1473 = vld [vmem:[#allocation10] sm:$0xff]
        %v1474 = vld [vmem:[#allocation10 + $0x8] sm:$0xff]
        %v1475 = vld [vmem:[#allocation10 + $0x10] sm:$0xff]
        %v1476 = vld [vmem:[#allocation10 + $0x18] sm:$0xff]
        %v1477 = vld [vmem:[%s11] sm:$0x1]
        %v1479 = vperm.slane %v1477, 0
        %v1482 = vsel %vm960, %v949, 0
        %1484 = vmatpush.msra.mxu0 0.0
        %1485 = vmatpush.msra.mxu0 0.0
        %1486 = vmatpush.msra.mxu0 0.0
        %1487 = vmatpush.msra.mxu0 0.0
        %1488 = vmatpush.msra.mxu0 0.0
        %1489 = vmatpush.msra.mxu0 0.0
        %1490 = vmatpush.msra.mxu0 0.0
        %1491 = vmatpush.msra.mxu0 0.0
        %1492 = vmatpush.msra.mxu0 0.0
        %1493 = vmatpush.msra.mxu0 0.0
        %1494 = vmatpush.msra.mxu0 0.0
        %1495 = vmatpush.msra.mxu0 0.0
        %1496 = vmatpush.msra.mxu0 %v1476
        %1497 = vmatpush.msra.mxu0 %v1475
        %1498 = vmatpush.msra.mxu0 %v1474
        %1499 = vmatpush.msra.mxu0 %v1473
        %1500 = vmatmul.f32.gmra.mxu0 %v1482
        %v1501 = vpop.f32.mrf.mxu0
        %v1502 = vadd.f32 %v1479, %v1501
        %1503 = vdwg.mxu0
        %v1504 = vld [vmem:[%s13] sm:$0x1]
        %v1506 = vperm.slane %v951, 0
        %v1509 = vsel %vm991, %v1471, 0
        %v1512 = vsel %vm991, %v1502, 0
        %1514 = vmatpush.xpose.msra.mxu0 0.0
        %1515 = vmatpush.xpose.msra.mxu0 0.0
        %1516 = vmatpush.xpose.msra.mxu0 0.0
        %1517 = vmatpush.xpose.msra.mxu0 0.0
        %1518 = vmatpush.xpose.msra.mxu0 0.0
        %1519 = vmatpush.xpose.msra.mxu0 0.0
        %1520 = vmatpush.xpose.msra.mxu0 0.0
        %1521 = vmatpush.xpose.msra.mxu0 0.0
        %1522 = vmatpush.xpose.msra.mxu0 0.0
        %1523 = vmatpush.xpose.msra.mxu0 0.0
        %1524 = vmatpush.xpose.msra.mxu0 0.0
        %1525 = vmatpush.xpose.msra.mxu0 0.0
        %1526 = vmatpush.xpose.msra.mxu0 0.0
        %1527 = vmatpush.xpose.msra.mxu0 0.0
        %1528 = vmatpush.xpose.msra.mxu0 0.0
        %1529 = vmatpush.xpose.msra.mxu0 %v1512
        %1530 = vmatmul.f32.gmra.mxu0 %v1509
        %v1531 = vpop.f32.mrf.mxu0
        %v1532 = vadd.f32 %v1506, %v1531
        %1533 = vdwg.mxu0
        %v1534 = vsel %vm991, %v1532, -inf
        %1535 = vmax.xlane.f32.xlu0 %v1534
        %v1536 = vpop.xlane.xlu0 %1535
        %v1537 = vsub.f32 %v1532, %v1536
        %v1538 = vmul.f32 %v1537, 1.442695
        %v1539 = vpow.pop %v1538
        %v1540 = vsel %vm991, %v1539, 0.0
        %1541 = vadd.xlane.f32.xlu0 %v1540
        %v1542 = vpop.xlane.xlu0 %1541
        %v1543 = vrcp.pop %v1542
        %v1544 = vmul.f32 %v1542, %v1543
        %v1545 = vsub.f32 1.0, %v1544
        %v1546 = vmul.f32 %v1543, %v1545
        %v1547 = vadd.f32 %v1543, %v1546
        %vm1548 = vweird.f32 %v1542
        %vm1549 = vweird.f32 %v1543
        %vm1550 = vmor %vm1548, %vm1549
        %v1551 = vsel %vm1550, %v1543, %v1547
        %v1552 = vand.u32 2147483647, %v1542
        %vm1553 = vcmp.eq.f32.partialorder %v1552, 8.507059e+37
        %v1554 = vand.u32 %v1542, 2147483648
        %v1555 = vor.u32 1.1754944e-38, %v1554
        %v1556 = vsel %vm1553, %v1555, %v1551
        %v1557 = vmul.f32 %v1539, %v1556
        %1558 = vrot.lane.b32.xlu0 %v1502, 96
        %v1559 = vpop.permute.xlu0 %1558
        %v1562 = vsel %vm991, %v1557, 0
        %1564 = vmatpush.msra.mxu0 0.0
        %1565 = vmatpush.msra.mxu0 0.0
        %1566 = vmatpush.msra.mxu0 0.0
        %1567 = vmatpush.msra.mxu0 0.0
        %1568 = vmatpush.msra.mxu0 0.0
        %1569 = vmatpush.msra.mxu0 0.0
        %1570 = vmatpush.msra.mxu0 0.0
        %1571 = vmatpush.msra.mxu0 0.0
        %1572 = vmatpush.msra.mxu0 0.0
        %1573 = vmatpush.msra.mxu0 0.0
        %1574 = vmatpush.msra.mxu0 0.0
        %1575 = vmatpush.msra.mxu0 0.0
        %1576 = vmatpush.msra.mxu0 0.0
        %1577 = vmatpush.msra.mxu0 0.0
        %1578 = vmatpush.msra.mxu0 0.0
        %1579 = vmatpush.msra.mxu0 %v1559
        %1580 = vmatmul.f32.gmra.mxu0 %v1562
        %v1581 = vpop.f32.mrf.mxu0
        %v1582 = vadd.f32 0.0, %v1581
        %1583 = vdwg.mxu0
        %v1584 = vld [vmem:[#allocation11] sm:$0xff]
        %1585 = vrot.lane.b32.xlu0 %v1471, 120
        %v1586 = vpop.permute.xlu0 %1585
        %1587 = vrot.lane.b32.xlu0 %v1502, 120
        %v1588 = vpop.permute.xlu0 %1587
        %v1589 = vsel %vm991, %v1586, 0
        %v1591 = vsel %vm991, %v1588, 0
        %1593 = vmatpush.xpose.msra.mxu0 0.0
        %1594 = vmatpush.xpose.msra.mxu0 0.0
        %1595 = vmatpush.xpose.msra.mxu0 0.0
        %1596 = vmatpush.xpose.msra.mxu0 0.0
        %1597 = vmatpush.xpose.msra.mxu0 0.0
        %1598 = vmatpush.xpose.msra.mxu0 0.0
        %1599 = vmatpush.xpose.msra.mxu0 0.0
        %1600 = vmatpush.xpose.msra.mxu0 0.0
        %1601 = vmatpush.xpose.msra.mxu0 0.0
        %1602 = vmatpush.xpose.msra.mxu0 0.0
        %1603 = vmatpush.xpose.msra.mxu0 0.0
        %1604 = vmatpush.xpose.msra.mxu0 0.0
        %1605 = vmatpush.xpose.msra.mxu0 0.0
        %1606 = vmatpush.xpose.msra.mxu0 0.0
        %1607 = vmatpush.xpose.msra.mxu0 0.0
        %1608 = vmatpush.xpose.msra.mxu0 %v1591
        %1609 = vmatmul.f32.gmra.mxu0 %v1589
        %v1610 = vpop.f32.mrf.mxu0
        %v1611 = vadd.f32 %v1506, %v1610
        %1612 = vdwg.mxu0
        %v1613 = vsel %vm991, %v1611, -inf
        %1614 = vmax.xlane.f32.xlu0 %v1613
        %v1615 = vpop.xlane.xlu0 %1614
        %v1616 = vsub.f32 %v1611, %v1615
        %v1617 = vmul.f32 %v1616, 1.442695
        %v1618 = vpow.pop %v1617
        %v1619 = vsel %vm991, %v1618, 0.0
        %1620 = vadd.xlane.f32.xlu0 %v1619
        %v1621 = vpop.xlane.xlu0 %1620
        %v1622 = vrcp.pop %v1621
        %v1623 = vmul.f32 %v1621, %v1622
        %v1624 = vsub.f32 1.0, %v1623
        %v1625 = vmul.f32 %v1622, %v1624
        %v1626 = vadd.f32 %v1622, %v1625
        %vm1627 = vweird.f32 %v1621
        %vm1628 = vweird.f32 %v1622
        %vm1629 = vmor %vm1627, %vm1628
        %v1630 = vsel %vm1629, %v1622, %v1626
        %v1631 = vand.u32 2147483647, %v1621
        %vm1632 = vcmp.eq.f32.partialorder %v1631, 8.507059e+37
        %v1633 = vand.u32 %v1621, 2147483648
        %v1634 = vor.u32 1.1754944e-38, %v1633
        %v1635 = vsel %vm1632, %v1634, %v1630
        %v1636 = vmul.f32 %v1618, %v1635
        %1637 = vrot.lane.b32.xlu0 %v1502, 88
        %v1638 = vpop.permute.xlu0 %1637
        %v1641 = vsel %vm991, %v1636, 0
        %1643 = vmatpush.msra.mxu0 0.0
        %1644 = vmatpush.msra.mxu0 0.0
        %1645 = vmatpush.msra.mxu0 0.0
        %1646 = vmatpush.msra.mxu0 0.0
        %1647 = vmatpush.msra.mxu0 0.0
        %1648 = vmatpush.msra.mxu0 0.0
        %1649 = vmatpush.msra.mxu0 0.0
        %1650 = vmatpush.msra.mxu0 0.0
        %1651 = vmatpush.msra.mxu0 0.0
        %1652 = vmatpush.msra.mxu0 0.0
        %1653 = vmatpush.msra.mxu0 0.0
        %1654 = vmatpush.msra.mxu0 0.0
        %1655 = vmatpush.msra.mxu0 0.0
        %1656 = vmatpush.msra.mxu0 0.0
        %1657 = vmatpush.msra.mxu0 0.0
        %1658 = vmatpush.msra.mxu0 %v1638
        %1659 = vmatmul.f32.gmra.mxu0 %v1641
        %v1660 = vpop.f32.mrf.mxu0
        %v1661 = vadd.f32 0.0, %v1660
        %1662 = vdwg.mxu0
        %v1663 = vld [vmem:[#allocation11 + $0x8] sm:$0xff]
        %v1665 = vsel %vm991, %v1661, 0
        %1667 = vmatpush.msra.mxu0 0.0
        %1668 = vmatpush.msra.mxu0 0.0
        %1669 = vmatpush.msra.mxu0 0.0
        %1670 = vmatpush.msra.mxu0 0.0
        %1671 = vmatpush.msra.mxu0 0.0
        %1672 = vmatpush.msra.mxu0 0.0
        %1673 = vmatpush.msra.mxu0 0.0
        %1674 = vmatpush.msra.mxu0 0.0
        %1675 = vmatpush.msra.mxu0 0.0
        %1676 = vmatpush.msra.mxu0 0.0
        %1677 = vmatpush.msra.mxu0 0.0
        %1678 = vmatpush.msra.mxu0 0.0
        %1679 = vmatpush.msra.mxu0 0.0
        %1680 = vmatpush.msra.mxu0 0.0
        %1681 = vmatpush.msra.mxu0 0.0
        %1682 = vmatpush.msra.mxu0 %v1663
        %1683 = vmatmul.f32.gmra.mxu0 %v1665
        %v1684 = vpop.f32.mrf.mxu0
        %v1685 = vadd.f32 0.0, %v1684
        %1686 = vdwg.mxu0
        %v1688 = vsel %vm991, %v1582, 0
        %1690 = vmatpush.msra.mxu0 0.0
        %1691 = vmatpush.msra.mxu0 0.0
        %1692 = vmatpush.msra.mxu0 0.0
        %1693 = vmatpush.msra.mxu0 0.0
        %1694 = vmatpush.msra.mxu0 0.0
        %1695 = vmatpush.msra.mxu0 0.0
        %1696 = vmatpush.msra.mxu0 0.0
        %1697 = vmatpush.msra.mxu0 0.0
        %1698 = vmatpush.msra.mxu0 0.0
        %1699 = vmatpush.msra.mxu0 0.0
        %1700 = vmatpush.msra.mxu0 0.0
        %1701 = vmatpush.msra.mxu0 0.0
        %1702 = vmatpush.msra.mxu0 0.0
        %1703 = vmatpush.msra.mxu0 0.0
        %1704 = vmatpush.msra.mxu0 0.0
        %1705 = vmatpush.msra.mxu0 %v1584
        %1706 = vmatmul.f32.gmra.mxu0 %v1688
        %v1707 = vpop.f32.mrf.mxu0
        %v1708 = vadd.f32 %v1685, %v1707
        %1709 = vdwg.mxu0
        %1710 = vrot.lane.b32.xlu0 %v1471, 112
        %v1711 = vpop.permute.xlu0 %1710
        %1712 = vrot.lane.b32.xlu0 %v1502, 112
        %v1713 = vpop.permute.xlu0 %1712
        %v1714 = vsel %vm991, %v1711, 0
        %v1716 = vsel %vm991, %v1713, 0
        %1718 = vmatpush.xpose.msra.mxu0 0.0
        %1719 = vmatpush.xpose.msra.mxu0 0.0
        %1720 = vmatpush.xpose.msra.mxu0 0.0
        %1721 = vmatpush.xpose.msra.mxu0 0.0
        %1722 = vmatpush.xpose.msra.mxu0 0.0
        %1723 = vmatpush.xpose.msra.mxu0 0.0
        %1724 = vmatpush.xpose.msra.mxu0 0.0
        %1725 = vmatpush.xpose.msra.mxu0 0.0
        %1726 = vmatpush.xpose.msra.mxu0 0.0
        %1727 = vmatpush.xpose.msra.mxu0 0.0
        %1728 = vmatpush.xpose.msra.mxu0 0.0
        %1729 = vmatpush.xpose.msra.mxu0 0.0
        %1730 = vmatpush.xpose.msra.mxu0 0.0
        %1731 = vmatpush.xpose.msra.mxu0 0.0
        %1732 = vmatpush.xpose.msra.mxu0 0.0
        %1733 = vmatpush.xpose.msra.mxu0 %v1716
        %1734 = vmatmul.f32.gmra.mxu0 %v1714
        %v1735 = vpop.f32.mrf.mxu0
        %v1736 = vadd.f32 %v1506, %v1735
        %1737 = vdwg.mxu0
        %v1738 = vsel %vm991, %v1736, -inf
        %1739 = vmax.xlane.f32.xlu0 %v1738
        %v1740 = vpop.xlane.xlu0 %1739
        %v1741 = vsub.f32 %v1736, %v1740
        %v1742 = vmul.f32 %v1741, 1.442695
        %v1743 = vpow.pop %v1742
        %v1744 = vsel %vm991, %v1743, 0.0
        %1745 = vadd.xlane.f32.xlu0 %v1744
        %v1746 = vpop.xlane.xlu0 %1745
        %v1747 = vrcp.pop %v1746
        %v1748 = vmul.f32 %v1746, %v1747
        %v1749 = vsub.f32 1.0, %v1748
        %v1750 = vmul.f32 %v1747, %v1749
        %v1751 = vadd.f32 %v1747, %v1750
        %vm1752 = vweird.f32 %v1746
        %vm1753 = vweird.f32 %v1747
        %vm1754 = vmor %vm1752, %vm1753
        %v1755 = vsel %vm1754, %v1747, %v1751
        %v1756 = vand.u32 2147483647, %v1746
        %vm1757 = vcmp.eq.f32.partialorder %v1756, 8.507059e+37
        %v1758 = vand.u32 %v1746, 2147483648
        %v1759 = vor.u32 1.1754944e-38, %v1758
        %v1760 = vsel %vm1757, %v1759, %v1755
        %v1761 = vmul.f32 %v1743, %v1760
        %1762 = vrot.lane.b32.xlu0 %v1502, 80
        %v1763 = vpop.permute.xlu0 %1762
        %v1766 = vsel %vm991, %v1761, 0
        %1768 = vmatpush.msra.mxu0 0.0
        %1769 = vmatpush.msra.mxu0 0.0
        %1770 = vmatpush.msra.mxu0 0.0
        %1771 = vmatpush.msra.mxu0 0.0
        %1772 = vmatpush.msra.mxu0 0.0
        %1773 = vmatpush.msra.mxu0 0.0
        %1774 = vmatpush.msra.mxu0 0.0
        %1775 = vmatpush.msra.mxu0 0.0
        %1776 = vmatpush.msra.mxu0 0.0
        %1777 = vmatpush.msra.mxu0 0.0
        %1778 = vmatpush.msra.mxu0 0.0
        %1779 = vmatpush.msra.mxu0 0.0
        %1780 = vmatpush.msra.mxu0 0.0
        %1781 = vmatpush.msra.mxu0 0.0
        %1782 = vmatpush.msra.mxu0 0.0
        %1783 = vmatpush.msra.mxu0 %v1763
        %1784 = vmatmul.f32.gmra.mxu0 %v1766
        %v1785 = vpop.f32.mrf.mxu0
        %v1786 = vadd.f32 0.0, %v1785
        %1787 = vdwg.mxu0
        %v1788 = vld [vmem:[#allocation11 + $0x10] sm:$0xff]
        %v1790 = vsel %vm991, %v1786, 0
        %1792 = vmatpush.msra.mxu0 0.0
        %1793 = vmatpush.msra.mxu0 0.0
        %1794 = vmatpush.msra.mxu0 0.0
        %1795 = vmatpush.msra.mxu0 0.0
        %1796 = vmatpush.msra.mxu0 0.0
        %1797 = vmatpush.msra.mxu0 0.0
        %1798 = vmatpush.msra.mxu0 0.0
        %1799 = vmatpush.msra.mxu0 0.0
        %1800 = vmatpush.msra.mxu0 0.0
        %1801 = vmatpush.msra.mxu0 0.0
        %1802 = vmatpush.msra.mxu0 0.0
        %1803 = vmatpush.msra.mxu0 0.0
        %1804 = vmatpush.msra.mxu0 0.0
        %1805 = vmatpush.msra.mxu0 0.0
        %1806 = vmatpush.msra.mxu0 0.0
        %1807 = vmatpush.msra.mxu0 %v1788
        %1808 = vmatmul.f32.gmra.mxu0 %v1790
        %v1809 = vpop.f32.mrf.mxu0
        %v1810 = vadd.f32 0.0, %v1809
        %1811 = vdwg.mxu0
        %v1812 = vadd.f32 %v1708, %v1810
        %1813 = vrot.lane.b32.xlu0 %v1471, 104
        %v1814 = vpop.permute.xlu0 %1813
        %1815 = vrot.lane.b32.xlu0 %v1502, 104
        %v1816 = vpop.permute.xlu0 %1815
        %v1817 = vsel %vm991, %v1814, 0
        %v1819 = vsel %vm991, %v1816, 0
        %1821 = vmatpush.xpose.msra.mxu0 0.0
        %1822 = vmatpush.xpose.msra.mxu0 0.0
        %1823 = vmatpush.xpose.msra.mxu0 0.0
        %1824 = vmatpush.xpose.msra.mxu0 0.0
        %1825 = vmatpush.xpose.msra.mxu0 0.0
        %1826 = vmatpush.xpose.msra.mxu0 0.0
        %1827 = vmatpush.xpose.msra.mxu0 0.0
        %1828 = vmatpush.xpose.msra.mxu0 0.0
        %1829 = vmatpush.xpose.msra.mxu0 0.0
        %1830 = vmatpush.xpose.msra.mxu0 0.0
        %1831 = vmatpush.xpose.msra.mxu0 0.0
        %1832 = vmatpush.xpose.msra.mxu0 0.0
        %1833 = vmatpush.xpose.msra.mxu0 0.0
        %1834 = vmatpush.xpose.msra.mxu0 0.0
        %1835 = vmatpush.xpose.msra.mxu0 0.0
        %1836 = vmatpush.xpose.msra.mxu0 %v1819
        %1837 = vmatmul.f32.gmra.mxu0 %v1817
        %v1838 = vpop.f32.mrf.mxu0
        %v1839 = vadd.f32 %v1506, %v1838
        %1840 = vdwg.mxu0
        %v1841 = vsel %vm991, %v1839, -inf
        %1842 = vmax.xlane.f32.xlu0 %v1841
        %v1843 = vpop.xlane.xlu0 %1842
        %v1844 = vsub.f32 %v1839, %v1843
        %v1845 = vmul.f32 %v1844, 1.442695
        %v1846 = vpow.pop %v1845
        %v1847 = vsel %vm991, %v1846, 0.0
        %1848 = vadd.xlane.f32.xlu0 %v1847
        %v1849 = vpop.xlane.xlu0 %1848
        %v1850 = vrcp.pop %v1849
        %v1851 = vmul.f32 %v1849, %v1850
        %v1852 = vsub.f32 1.0, %v1851
        %v1853 = vmul.f32 %v1850, %v1852
        %v1854 = vadd.f32 %v1850, %v1853
        %vm1855 = vweird.f32 %v1849
        %vm1856 = vweird.f32 %v1850
        %vm1857 = vmor %vm1855, %vm1856
        %v1858 = vsel %vm1857, %v1850, %v1854
        %v1859 = vand.u32 2147483647, %v1849
        %vm1860 = vcmp.eq.f32.partialorder %v1859, 8.507059e+37
        %v1861 = vand.u32 %v1849, 2147483648
        %v1862 = vor.u32 1.1754944e-38, %v1861
        %v1863 = vsel %vm1860, %v1862, %v1858
        %v1864 = vmul.f32 %v1846, %v1863
        %1865 = vrot.lane.b32.xlu0 %v1502, 72
        %v1866 = vpop.permute.xlu0 %1865
        %v1869 = vsel %vm991, %v1864, 0
        %1871 = vmatpush.msra.mxu0 0.0
        %1872 = vmatpush.msra.mxu0 0.0
        %1873 = vmatpush.msra.mxu0 0.0
        %1874 = vmatpush.msra.mxu0 0.0
        %1875 = vmatpush.msra.mxu0 0.0
        %1876 = vmatpush.msra.mxu0 0.0
        %1877 = vmatpush.msra.mxu0 0.0
        %1878 = vmatpush.msra.mxu0 0.0
        %1879 = vmatpush.msra.mxu0 0.0
        %1880 = vmatpush.msra.mxu0 0.0
        %1881 = vmatpush.msra.mxu0 0.0
        %1882 = vmatpush.msra.mxu0 0.0
        %1883 = vmatpush.msra.mxu0 0.0
        %1884 = vmatpush.msra.mxu0 0.0
        %1885 = vmatpush.msra.mxu0 0.0
        %1886 = vmatpush.msra.mxu0 %v1866
        %1887 = vmatmul.f32.gmra.mxu0 %v1869
        %v1888 = vpop.f32.mrf.mxu0
        %v1889 = vadd.f32 0.0, %v1888
        %1890 = vdwg.mxu0
        %v1891 = vld [vmem:[#allocation11 + $0x18] sm:$0xff]
        %v1893 = vsel %vm991, %v1889, 0
        %1895 = vmatpush.msra.mxu0 0.0
        %1896 = vmatpush.msra.mxu0 0.0
        %1897 = vmatpush.msra.mxu0 0.0
        %1898 = vmatpush.msra.mxu0 0.0
        %1899 = vmatpush.msra.mxu0 0.0
        %1900 = vmatpush.msra.mxu0 0.0
        %1901 = vmatpush.msra.mxu0 0.0
        %1902 = vmatpush.msra.mxu0 0.0
        %1903 = vmatpush.msra.mxu0 0.0
        %1904 = vmatpush.msra.mxu0 0.0
        %1905 = vmatpush.msra.mxu0 0.0
        %1906 = vmatpush.msra.mxu0 0.0
        %1907 = vmatpush.msra.mxu0 0.0
        %1908 = vmatpush.msra.mxu0 0.0
        %1909 = vmatpush.msra.mxu0 0.0
        %1910 = vmatpush.msra.mxu0 %v1891
        %1911 = vmatmul.f32.gmra.mxu0 %v1893
        %v1912 = vpop.f32.mrf.mxu0
        %v1913 = vadd.f32 0.0, %v1912
        %1914 = vdwg.mxu0
        %v1915 = vadd.f32 %v1812, %v1913
        %v1917 = vperm.slane %v1504, 0
        %v1919 = vadd.f32 %v1915, %v1917
        %1920 = vrot.lane.b32.xlu0 %v1636, 8
        %v1921 = vpop.permute.xlu0 %1920
        %1923 = vrot.lane.b32.xlu0 %v1761, 16
        %v1924 = vpop.permute.xlu0 %1923
        %1926 = vrot.lane.b32.xlu0 %v1864, 24
        %v1927 = vpop.permute.xlu0 %1926
        %v1929 = vsel %vm991, %v1557, %v1921
        %vm1930 = vcmask 130048
        %v1931 = vsel %vm1930, %v1929, %v1924
        %vm1932 = vcmask 195584
        %v1933 = vsel %vm1932, %v1931, %v1927
        %1934 = vst.msk [vmem:[%s947] sm:$0xff] %vm960, %v1933
        %v1935 = vadd.f32 %v1441, %v1919
        %v1936 = vld [vmem:[%s20] sm:$0x1]
        %v1937 = vld [vmem:[%s21] sm:$0x1]
        %v1938 = vsel %vm960, %v1935, 0.0
        %1939 = vadd.xlane.f32.xlu0 %v1938
        %v1940 = vpop.xlane.xlu0 %1939
        %v1941 = vmul.f32 %v1940, %v1414
        %v1942 = vsub.f32 %v1935, %v1941
        %v1943 = vmul.f32 %v1942, %v1942
        %v1944 = vsel %vm960, %v1943, 0.0
        %1945 = vadd.xlane.f32.xlu0 %v1944
        %v1946 = vpop.xlane.xlu0 %1945
        %v1947 = vmul.f32 %v1946, %v1414
        %v1948 = vadd.f32 %v1947, 1e-05
        %v1949 = vrsqrt.pop %v1948
        %v1950 = vmul.f32 %v1949, %v1948
        %v1951 = vmul.f32 %v1950, %v1949
        %v1952 = vmul.f32 0.5, %v1951
        %v1953 = vsub.f32 1.5, %v1952
        %v1954 = vmul.f32 %v1949, %v1953
        %vm1955 = vweird.f32 %v1948
        %vm1956 = vweird.f32 %v1949
        %vm1957 = vmor %vm1955, %vm1956
        %v1958 = vsel %vm1957, %v1949, %v1954
        %v1959 = vmul.f32 %v1942, %v1958
        %v1961 = vperm.slane %v1936, 0
        %v1963 = vmul.f32 %v1959, %v1961
        %v1965 = vperm.slane %v1937, 0
        %v1967 = vadd.f32 %v1963, %v1965
        %v1968 = vld [vmem:[#allocation13] sm:$0xff]
        %v1969 = vld [vmem:[#allocation13 + $0x8] sm:$0xff]
        %v1970 = vld [vmem:[#allocation13 + $0x10] sm:$0xff]
        %v1971 = vld [vmem:[#allocation13 + $0x18] sm:$0xff]
        %v1972 = vld [vmem:[%s15] sm:$0x1]
        %v1974 = vperm.slane %v1972, 0
        %v1977 = vsel %vm960, %v1967, 0
        %1979 = vmatpush.msra.mxu0 0.0
        %1980 = vmatpush.msra.mxu0 0.0
        %1981 = vmatpush.msra.mxu0 0.0
        %1982 = vmatpush.msra.mxu0 0.0
        %1983 = vmatpush.msra.mxu0 0.0
        %1984 = vmatpush.msra.mxu0 0.0
        %1985 = vmatpush.msra.mxu0 0.0
        %1986 = vmatpush.msra.mxu0 0.0
        %1987 = vmatpush.msra.mxu0 0.0
        %1988 = vmatpush.msra.mxu0 0.0
        %1989 = vmatpush.msra.mxu0 0.0
        %1990 = vmatpush.msra.mxu0 0.0
        %1991 = vmatpush.msra.mxu0 %v1971
        %1992 = vmatpush.msra.mxu0 %v1970
        %1993 = vmatpush.msra.mxu0 %v1969
        %1994 = vmatpush.msra.mxu0 %v1968
        %1995 = vmatmul.f32.gmra.mxu0 %v1977
        %v1996 = vpop.f32.mrf.mxu0
        %v1997 = vadd.f32 %v1974, %v1996
        %1998 = vdwg.mxu0
        %v1999 = vmax.f32 %v1997, 0.0
        %v2000 = vld [vmem:[%s16] sm:$0xff]
        %v2001 = vld [vmem:[%s16 + $0x8] sm:$0xff]
        %v2002 = vld [vmem:[%s16 + $0x10] sm:$0xff]
        %v2003 = vld [vmem:[%s16 + $0x18] sm:$0xff]
        %v2004 = vld [vmem:[%s16 + $0x20] sm:$0xff]
        %v2005 = vld [vmem:[%s16 + $0x28] sm:$0xff]
        %v2006 = vld [vmem:[%s16 + $0x30] sm:$0xff]
        %v2007 = vld [vmem:[%s16 + $0x38] sm:$0xff]
        %v2008 = vld [vmem:[%s17] sm:$0x1]
        %v2010 = vperm.slane %v2008, 0
        %vm2012 = vcmask 523264
        %v2014 = vsel %vm2012, %v1999, 0
        %2016 = vmatpush.msra.mxu0 0.0
        %2017 = vmatpush.msra.mxu0 0.0
        %2018 = vmatpush.msra.mxu0 0.0
        %2019 = vmatpush.msra.mxu0 0.0
        %2020 = vmatpush.msra.mxu0 0.0
        %2021 = vmatpush.msra.mxu0 0.0
        %2022 = vmatpush.msra.mxu0 0.0
        %2023 = vmatpush.msra.mxu0 0.0
        %2024 = vmatpush.msra.mxu0 %v2007
        %2025 = vmatpush.msra.mxu0 %v2006
        %2026 = vmatpush.msra.mxu0 %v2005
        %2027 = vmatpush.msra.mxu0 %v2004
        %2028 = vmatpush.msra.mxu0 %v2003
        %2029 = vmatpush.msra.mxu0 %v2002
        %2030 = vmatpush.msra.mxu0 %v2001
        %2031 = vmatpush.msra.mxu0 %v2000
        %2032 = vmatmul.f32.gmra.mxu0 %v2014
        %v2033 = vpop.f32.mrf.mxu0
        %v2034 = vadd.f32 %v2010, %v2033
        %2035 = vdwg.mxu0
        %v2036 = vadd.f32 %v1967, %v2034
        %v2037 = vld [vmem:[%s22] sm:$0x1]
        %v2038 = vld [vmem:[%s23] sm:$0x1]
        %v2039 = vsel %vm960, %v2036, 0.0
        %2040 = vadd.xlane.f32.xlu0 %v2039
        %v2041 = vpop.xlane.xlu0 %2040
        %v2042 = vmul.f32 %v2041, %v1414
        %v2043 = vsub.f32 %v2036, %v2042
        %v2044 = vmul.f32 %v2043, %v2043
        %v2045 = vsel %vm960, %v2044, 0.0
        %2046 = vadd.xlane.f32.xlu0 %v2045
        %v2047 = vpop.xlane.xlu0 %2046
        %v2048 = vmul.f32 %v2047, %v1414
        %v2049 = vadd.f32 %v2048, 1e-05
        %v2050 = vrsqrt.pop %v2049
        %v2051 = vmul.f32 %v2050, %v2049
        %v2052 = vmul.f32 %v2051, %v2050
        %v2053 = vmul.f32 0.5, %v2052
        %v2054 = vsub.f32 1.5, %v2053
        %v2055 = vmul.f32 %v2050, %v2054
        %vm2056 = vweird.f32 %v2049
        %vm2057 = vweird.f32 %v2050
        %vm2058 = vmor %vm2056, %vm2057
        %v2059 = vsel %vm2058, %v2050, %v2055
        %v2060 = vmul.f32 %v2043, %v2059
        %v2062 = vperm.slane %v2037, 0
        %v2064 = vmul.f32 %v2060, %v2062
        %v2066 = vperm.slane %v2038, 0
        %v2068 = vadd.f32 %v2064, %v2066
        %2069 = vst.msk [vmem:[%s940] sm:$0xff] %vm960, %v2068
        %s2070 = sand.u32 %s585, 1
        %s2071 = scalar_lea.sflag [#allocation4], %s2070
        %s2072 = sand.u32 %s585, 1
        %s2073 = smul.addr %s2072, 8
        %s2074 = scalar_lea.vmem [#allocation14], %s2073
        %s2075 = sand.u32 %s611, 1
        %s2076 = scalar_lea.sflag [#allocation16], %s2075
        %s2077 = sand.u32 %s611, 1
        %s2078 = smul.addr %s2077, 8
        %s2079 = scalar_lea.vmem [#allocation15], %s2078
        // Predicated region
        $region145: #{tpu_custom_call.1} parent=115 // pred_check
          %p2080 = pneg %p595
        $region146: #{tpu_custom_call.1} parent=115 // pred_check_branch
          %2082 = sbr.rel (%p2080) target = $region148
        $region147: #{tpu_custom_call.1} parent=115 // pred_region
          %2084 = vsyncadd %s2071, 0
          %s2085 = smul.addr %s53, 8
          %s2086 = scalar_lea.hbm %s24, %s2085
          %s2088 = sshll.u32 %s2074, 4
          %s2089 = int_to_ptr.vmem [resolvable:$true] %s2088
          %s2090 = sshll.u32 %s2086, 4
          %s2091 = int_to_ptr.hbm [resolvable:$true] %s2090
          %2093 = dma.vmem_to_hbm [thread:$0]  %s2089, 128, %s2091, %s2071
        $region148: #{tpu_custom_call.1} parent=115 // pred_fallthru
          _
        // Predicated region
        $region149: #{tpu_custom_call.1} parent=115 // pred_check
          %p2094 = pneg %p621
        $region150: #{tpu_custom_call.1} parent=115 // pred_check_branch
          %2096 = sbr.rel (%p2094) target = $region152
        $region151: #{tpu_custom_call.1} parent=115 // pred_region
          %2098 = vsyncadd %s2076, 0
          %s2099 = smul.addr %s53, 8
          %s2100 = scalar_lea.hbm %s25, %s2099
          %s2102 = sshll.u32 %s2079, 4
          %s2103 = int_to_ptr.vmem [resolvable:$true] %s2102
          %s2104 = sshll.u32 %s2100, 4
          %s2105 = int_to_ptr.hbm [resolvable:$true] %s2104
          %2107 = dma.vmem_to_hbm [thread:$0]  %s2103, 128, %s2105, %s2076
        $region152: #{tpu_custom_call.1} parent=115 // pred_fallthru
          _
      $region116: #{tpu_custom_call.1} parent=5 // pred_fallthru
        _
      %p2108 = scmp.le.s32.totalorder 2, %s48
      // Predicated region
      $region153: #{tpu_custom_call.1} parent=5 // pred_check
        %p2109 = pneg %p2108
      $region154: #{tpu_custom_call.1} parent=5 // pred_check_branch
        %2111 = sbr.rel (%p2109) target = $region156
      $region155: #{tpu_custom_call.1} parent=5 // pred_region
        %s2112 = ssub.s32 %s48, 2
        // Predicated region
        $region157: #{tpu_custom_call.1} parent=155 // pred_check
          %p2113 = pneg %p601
        $region158: #{tpu_custom_call.1} parent=155 // pred_check_branch
          %2115 = sbr.rel (%p2113) target = $region160
        $region159: #{tpu_custom_call.1} parent=155 // pred_region
          %s2116 = sand.u32 %s586, 1
          %s2117 = scalar_lea.sflag [#allocation4], %s2116
          %s2118 = sand.u32 %s586, 1
          %s2119 = smul.addr %s2118, 8
          %s2120 = scalar_lea.vmem [#allocation14], %s2119
          %2122 = dma.done %s2117, 128
        $region160: #{tpu_custom_call.1} parent=155 // pred_fallthru
          _
        // Predicated region
        $region161: #{tpu_custom_call.1} parent=155 // pred_check
          %p2123 = pneg %p627
        $region162: #{tpu_custom_call.1} parent=155 // pred_check_branch
          %2125 = sbr.rel (%p2123) target = $region164
        $region163: #{tpu_custom_call.1} parent=155 // pred_region
          %s2126 = sand.u32 %s612, 1
          %s2127 = scalar_lea.sflag [#allocation16], %s2126
          %s2128 = sand.u32 %s612, 1
          %s2129 = smul.addr %s2128, 8
          %s2130 = scalar_lea.vmem [#allocation15], %s2129
          %2132 = dma.done %s2127, 128
        $region164: #{tpu_custom_call.1} parent=155 // pred_fallthru
          _
      $region156: #{tpu_custom_call.1} parent=5 // pred_fallthru
        _
    $region6: #{tpu_custom_call.1} parent=1 // loop_footer
      %s52 = sadd.s32 1, %s48
    $region7: #{tpu_custom_call.1} parent=1 // loop_footer_branch
      %47 = sbr.rel target = $region3
    $region8: #{tpu_custom_call.1} parent=1 // loop_exit
      _
    %2133 = vsyncpa [#allocation3], 1
    %s2134 = scalar_lea.sflag [#allocation3], 1
    %2135 = vsyncpa %s2134, 1
    %2136 = vsyncpa [#allocation6], 1
    %s2137 = scalar_lea.sflag [#allocation6], 1
    %2138 = vsyncpa %s2137, 1
    %2139 = vsyncpa [#allocation9], 1
    %s2140 = scalar_lea.sflag [#allocation9], 1
    %2141 = vsyncpa %s2140, 1
    %2142 = vsyncpa [#allocation12], 1
    %2143 = vsyncpa [#allocation4], 1
    %s2144 = scalar_lea.sflag [#allocation4], 1
    %2145 = vsyncpa %s2144, 1
    %2146 = vsyncpa [#allocation16], 1
    %s2147 = scalar_lea.sflag [#allocation16], 1
    %2148 = vsyncpa %s2147, 1

</llo_original>
